<compile_context>
chip_gen: v7x
topology: tpu7x:2x2x1
jax: 0.10.0
libtpu: 0.0.40
codegen_flags: <defaults>
</compile_context>

<pallas_src>
import math
import numpy as np
import jax
import jax.numpy as jnp
from jax import lax
from jax.experimental import pallas as pl
from jax.experimental.pallas import tpu as pltpu

# --- static model config (small, deterministic synthetic weights) ---
B = 2          # batch
S = 8          # sequence length
D_MODEL = 32   # d_model
N_HEADS = 4    # attention heads
D_K = D_MODEL // N_HEADS
D_FF = 64      # feed-forward hidden size
LN_EPS = 1e-5  # torch.nn.LayerNorm default

# packed weight slab layout (bf16): [2*D_MODEL + D_FF, 2*D_MODEL + N_HEADS*D_MODEL]
W_COLS = 2 * D_MODEL + N_HEADS * D_MODEL   # 192
W_ROWS = 2 * D_MODEL + D_FF                # 128
# packed small-param slab layout (f32): [8, 128]
#   row 0: ln1_g   row 1: ln1_b   row 2: ln2_g   row 3: ln2_b
#   row 4: [bq/sqrt(dk) | bk]  (64)      row 5: b1 (64)
#   row 6: bvo (128)                     row 7: [bo (0:32) | b2 (32:64)]
P_ROWS, P_COLS = 8, 128


def _layer_norm(v, g, b):
    mu = jnp.mean(v, axis=-1, keepdims=True)
    var = jnp.mean((v - mu) ** 2, axis=-1, keepdims=True)
    return (v - mu) * lax.rsqrt(var + LN_EPS) * g + b


def encoder_layer_kernel(x_ref, mask_ref, w_ref, p_ref, out_ref):
    x = x_ref[...]                     # [B*S, D] f32 (flattened in wrapper)
    mask = mask_ref[...]               # [B, S]   f32
    P = p_ref[...]                     # [8, 128] f32 small-param slab (1 vreg)

    ln1_g = P[0:1, 0:D_MODEL]
    ln1_b = P[1:2, 0:D_MODEL]
    ln2_g = P[2:3, 0:D_MODEL]
    ln2_b = P[3:4, 0:D_MODEL]
    bqk   = P[4:5, 0:2 * D_MODEL]                  # [bq/sqrt(dk) | bk]
    b1    = P[5:6, 0:D_FF]
    bvo   = P[6:7, 0:N_HEADS * D_MODEL]            # per-head bv @ wo[h], concat
    bo    = P[7:8, 0:D_MODEL]
    b2    = P[7:8, D_MODEL:2 * D_MODEL]

    # bf16 weights from the packed slab (full-lane row loads + value lane-slices).
    w_attn = w_ref[0:D_MODEL, :]                                    # [32, 192] = [wq' | wk | wvo]
    w1 = w_ref[D_MODEL:2 * D_MODEL, :][:, 0:D_FF]                   # [32, 64]
    w2 = w_ref[2 * D_MODEL:2 * D_MODEL + D_FF, :][:, 0:D_MODEL]     # [64, 32]

    # Additive attention bias, computed ONCE (hoisted out of batch/head loops).
    # Note: if a row of `mask` were all zero, every score becomes -1e9 and
    # softmax degrades to uniform weights (same as the reference, no NaN).
    neg_bias = jnp.where(mask == 0.0, jnp.float32(-1e9), jnp.float32(0.0))   # [B, S]

    # ---- sublayer 0: self-attention + residual ----
    ln1 = _layer_norm(x, ln1_g, ln1_b)
    # One fused projection: [16,32] x [32,192] -> q' | k | (v @ W_O folded).
    proj = jnp.dot(ln1.astype(jnp.bfloat16), w_attn,
                   preferred_element_type=jnp.float32)              # [B*S, 192] f32
    qk = proj[:, 0:2 * D_MODEL] + bqk          # [B*S, 64], q already pre-scaled
    vwo = proj[:, 2 * D_MODEL:] + bvo          # [B*S, 128], head h at cols h*D:(h+1)*D
    qk_bf = qk.astype(jnp.bfloat16)
    vwo_bf = vwo.astype(jnp.bfloat16)

    dn = (((1,), (1,)), ((), ()))      # contract last dims: q @ k^T, no transpose op

    attn_rows = []
    for b in range(B):                 # static unroll (B=2); scores are per-batch [S,S]
        r0, r1 = b * S, (b + 1) * S
        bias_b = neg_bias[b:b + 1, :]  # [1, S], broadcast over query rows
        acc = jnp.zeros((S, D_MODEL), jnp.float32)
        for h in range(N_HEADS):       # static unroll over heads
            qh = qk_bf[r0:r1, h * D_K:(h + 1) * D_K]                       # [S, D_K] bf16
            kh = qk_bf[r0:r1, D_MODEL + h * D_K:D_MODEL + (h + 1) * D_K]   # [S, D_K] bf16
            scores = lax.dot_general(qh, kh, dn,
                                     preferred_element_type=jnp.float32) + bias_b
            m = jnp.max(scores, axis=-1, keepdims=True)
            p = jnp.exp(scores - m)
            p = p * pl.reciprocal(jnp.sum(p, axis=-1, keepdims=True), approx=True)
            acc = acc + jnp.dot(p.astype(jnp.bfloat16),
                                vwo_bf[r0:r1, h * D_MODEL:(h + 1) * D_MODEL],
                                preferred_element_type=jnp.float32)
        attn_rows.append(acc)
    attn = jnp.concatenate(attn_rows, axis=0) + bo   # sublane-axis concat (cheap)

    x1 = x + attn                      # residual (dropout == identity in eval)

    # ---- sublayer 1: position-wise feed-forward + residual ----
    ln2 = _layer_norm(x1, ln2_g, ln2_b)
    h1 = jnp.dot(ln2.astype(jnp.bfloat16), w1,
                 preferred_element_type=jnp.float32) + b1
    h1 = jnp.maximum(h1, 0.0)
    ff = jnp.dot(h1.astype(jnp.bfloat16), w2,
                 preferred_element_type=jnp.float32) + b2

    # NOTE: output last dim is D=32 (<128 lanes) -> masked partial stores; at
    # 2 KB total output a lane-dense relayout would cost more than it saves.
    out_ref[...] = (x1 + ff).astype(out_ref.dtype)


def prepare_params(params):
    """One-time packing: fold scales/W_O, cast big weights to bf16 once, and
    pack everything into two slabs (done at parameter-prep time, NOT per call)."""
    (ln1_g, ln1_b, wq, bq, wk, bk, wv, bv, wo, bo,
     ln2_g, ln2_b, w1, b1, w2, b2) = params

    inv_sqrt_dk = 1.0 / math.sqrt(D_K)
    wq_s = wq * inv_sqrt_dk
    bq_s = bq * inv_sqrt_dk

    # Exact linear fold of W_O into the value path, per head (f32, one bf16 cast later).
    wvo = jnp.concatenate(
        [wv[:, h * D_K:(h + 1) * D_K] @ wo[h * D_K:(h + 1) * D_K, :]
         for h in range(N_HEADS)], axis=1)                    # [D_MODEL, H*D_MODEL]
    bvo = jnp.concatenate(
        [bv[:, h * D_K:(h + 1) * D_K] @ wo[h * D_K:(h + 1) * D_K, :]
         for h in range(N_HEADS)], axis=1)                    # [1, H*D_MODEL]

    w_attn = jnp.concatenate([wq_s, wk, wvo], axis=1)         # [32, 192]

    w_slab = jnp.zeros((W_ROWS, W_COLS), jnp.float32)
    w_slab = w_slab.at[0:D_MODEL, :].set(w_attn)
    w_slab = w_slab.at[D_MODEL:2 * D_MODEL, 0:D_FF].set(w1)
    w_slab = w_slab.at[2 * D_MODEL:2 * D_MODEL + D_FF, 0:D_MODEL].set(w2)
    w_slab = w_slab.astype(jnp.bfloat16)                      # single bf16 cast, offline

    p_slab = jnp.zeros((P_ROWS, P_COLS), jnp.float32)
    p_slab = p_slab.at[0, 0:D_MODEL].set(ln1_g[0])
    p_slab = p_slab.at[1, 0:D_MODEL].set(ln1_b[0])
    p_slab = p_slab.at[2, 0:D_MODEL].set(ln2_g[0])
    p_slab = p_slab.at[3, 0:D_MODEL].set(ln2_b[0])
    p_slab = p_slab.at[4, 0:D_MODEL].set(bq_s[0])
    p_slab = p_slab.at[4, D_MODEL:2 * D_MODEL].set(bk[0])
    p_slab = p_slab.at[5, 0:D_FF].set(b1[0])
    p_slab = p_slab.at[6, 0:N_HEADS * D_MODEL].set(bvo[0])
    p_slab = p_slab.at[7, 0:D_MODEL].set(bo[0])
    p_slab = p_slab.at[7, D_MODEL:2 * D_MODEL].set(b2[0])
    return w_slab, p_slab


def encoder_layer(x, mask, w_slab, p_slab):
    """x: [B, S, D] f32, mask: [B, 1, S] f32, slabs from prepare_params()."""
    Bx, Sx, Dx = x.shape
    x2 = x.reshape(Bx * Sx, Dx)        # flatten batch*seq for all dense matmuls
    mask2 = mask.reshape(Bx, Sx)

    # Whole problem (~2 KB activations + ~50 KB packed slabs) lives in VMEM and
    # runs as a single no-grid invocation with only 4 operand DMAs.
    vmem = pltpu.MemorySpace.VMEM
    out = pl.pallas_call(
        encoder_layer_kernel,
        out_shape=jax.ShapeDtypeStruct((Bx * Sx, Dx), x.dtype),
        in_specs=[pl.BlockSpec(memory_space=vmem)] * 4,
        out_specs=pl.BlockSpec(memory_space=vmem),
    )(x2, mask2, w_slab, p_slab)
    return out.reshape(Bx, Sx, Dx)


def encoder_layer_ref(x, mask, params):
    """Pure-JAX f32 reference with identical semantics (for sanity checking)."""
    (ln1_g, ln1_b, wq, bq, wk, bk, wv, bv, wo, bo,
     ln2_g, ln2_b, w1, b1, w2, b2) = params

    def ln(v, g, b):
        mu = jnp.mean(v, axis=-1, keepdims=True)
        var = jnp.mean((v - mu) ** 2, axis=-1, keepdims=True)
        return (v - mu) / jnp.sqrt(var + LN_EPS) * g + b

    l1 = ln(x, ln1_g, ln1_b)
    q = l1 @ wq + bq
    k = l1 @ wk + bk
    v = l1 @ wv + bv
    Bx, Sx, _ = x.shape
    qh = q.reshape(Bx, Sx, N_HEADS, D_K).transpose(0, 2, 1, 3)
    kh = k.reshape(Bx, Sx, N_HEADS, D_K).transpose(0, 2, 1, 3)
    vh = v.reshape(Bx, Sx, N_HEADS, D_K).transpose(0, 2, 1, 3)
    scores = jnp.einsum("bhqd,bhkd->bhqk", qh, kh) / math.sqrt(D_K)
    scores = jnp.where(mask[:, None, :, :] == 0.0, -1e9, scores)
    p = jax.nn.softmax(scores, axis=-1)
    a = jnp.einsum("bhqk,bhkd->bhqd", p, vh).transpose(0, 2, 1, 3).reshape(Bx, Sx, D_MODEL)
    x1 = x + (a @ wo + bo)
    l2 = ln(x1, ln2_g, ln2_b)
    ff = jnp.maximum(l2 @ w1 + b1, 0.0) @ w2 + b2
    return x1 + ff


def make_params(key):
    ks = jax.random.split(key, 8)
    scale = 0.1
    wq = scale * jax.random.normal(ks[0], (D_MODEL, D_MODEL), jnp.float32)
    wk = scale * jax.random.normal(ks[1], (D_MODEL, D_MODEL), jnp.float32)
    wv = scale * jax.random.normal(ks[2], (D_MODEL, D_MODEL), jnp.float32)
    wo = scale * jax.random.normal(ks[3], (D_MODEL, D_MODEL), jnp.float32)
    w1 = scale * jax.random.normal(ks[4], (D_MODEL, D_FF), jnp.float32)
    w2 = scale * jax.random.normal(ks[5], (D_FF, D_MODEL), jnp.float32)
    bq = 0.01 * jax.random.normal(ks[6], (1, D_MODEL), jnp.float32)
    bk = jnp.zeros((1, D_MODEL), jnp.float32)
    bv = 0.02 * jnp.ones((1, D_MODEL), jnp.float32)
    bo = jnp.zeros((1, D_MODEL), jnp.float32)
    b1 = 0.01 * jax.random.normal(ks[7], (1, D_FF), jnp.float32)
    b2 = jnp.zeros((1, D_MODEL), jnp.float32)
    ln1_g = jnp.ones((1, D_MODEL), jnp.float32)
    ln1_b = jnp.zeros((1, D_MODEL), jnp.float32)
    ln2_g = jnp.ones((1, D_MODEL), jnp.float32)
    ln2_b = jnp.zeros((1, D_MODEL), jnp.float32)
    return [ln1_g, ln1_b, wq, bq, wk, bk, wv, bv, wo, bo,
            ln2_g, ln2_b, w1, b1, w2, b2]


if __name__ == "__main__":
    key = jax.random.PRNGKey(0)
    k_x, k_p = jax.random.split(key)

    x = jax.random.normal(k_x, (B, S, D_MODEL), jnp.float32)
    # mask: keep first S-2 key positions, mask the last 2 (broadcast over queries)
    mask = (jnp.arange(S) < (S - 2)).astype(jnp.float32).reshape(1, 1, S)
    mask = jnp.tile(mask, (B, 1, 1))

    params = make_params(k_p)
    # One-time parameter packing (bf16 cast, W_O fold, Q|K fusion, scale fold).
    w_slab, p_slab = prepare_params(params)
    w_slab = jax.block_until_ready(w_slab)
    p_slab = jax.block_until_ready(p_slab)

    out = jax.block_until_ready(encoder_layer(x, mask, w_slab, p_slab))
    ref = jax.block_until_ready(encoder_layer_ref(x, mask, params))

    assert out.shape == (B, S, D_MODEL)
    # Kernel uses bf16 weights AND bf16 operands for the attention-core matmuls
    # (f32 accumulation), so compare against the pure-f32 reference with a
    # bf16-appropriate tolerance.
    err = np.abs(np.asarray(out) - np.asarray(ref)).max()
    assert np.allclose(np.asarray(out), np.asarray(ref), atol=2e-2, rtol=2e-2), err

    print("KERNEL_OK")
</pallas_src>

<mosaic_0001>
module attributes {stable_mosaic.version = 11 : i64} {
  func.func @encoder_layer_kernel(%arg0: memref<16x32xf32, #tpu.memory_space<vmem>>, %arg1: memref<2x8xf32, #tpu.memory_space<vmem>>, %arg2: memref<128x192xbf16, #tpu.memory_space<vmem>>, %arg3: memref<8x128xf32, #tpu.memory_space<vmem>>, %arg4: memref<16x32xf32, #tpu.memory_space<vmem>>) attributes {dimension_semantics = [], scalar_prefetch = 0 : i64, scratch_operands = 0 : i64, tpu.core_type = #tpu.core_type<tc>} {
    %c0 = arith.constant 0 : index
    %c0_0 = arith.constant 0 : index
    %0 = vector.load %arg0[%c0, %c0_0] : memref<16x32xf32, #tpu.memory_space<vmem>>, vector<16x32xf32>
    %c0_1 = arith.constant 0 : index
    %c0_2 = arith.constant 0 : index
    %1 = vector.load %arg1[%c0_1, %c0_2] : memref<2x8xf32, #tpu.memory_space<vmem>>, vector<2x8xf32>
    %c0_3 = arith.constant 0 : index
    %c0_4 = arith.constant 0 : index
    %2 = vector.load %arg3[%c0_3, %c0_4] : memref<8x128xf32, #tpu.memory_space<vmem>>, vector<8x128xf32>
    %3 = vector.extract_strided_slice %2 {offsets = [0, 0], sizes = [1, 32], strides = [1, 1]} : vector<8x128xf32> to vector<1x32xf32>
    %4 = vector.extract_strided_slice %2 {offsets = [1, 0], sizes = [1, 32], strides = [1, 1]} : vector<8x128xf32> to vector<1x32xf32>
    %5 = vector.extract_strided_slice %2 {offsets = [2, 0], sizes = [1, 32], strides = [1, 1]} : vector<8x128xf32> to vector<1x32xf32>
    %6 = vector.extract_strided_slice %2 {offsets = [3, 0], sizes = [1, 32], strides = [1, 1]} : vector<8x128xf32> to vector<1x32xf32>
    %7 = vector.extract_strided_slice %2 {offsets = [4, 0], sizes = [1, 64], strides = [1, 1]} : vector<8x128xf32> to vector<1x64xf32>
    %8 = vector.extract_strided_slice %2 {offsets = [5, 0], sizes = [1, 64], strides = [1, 1]} : vector<8x128xf32> to vector<1x64xf32>
    %9 = vector.extract_strided_slice %2 {offsets = [6, 0], sizes = [1, 128], strides = [1, 1]} : vector<8x128xf32> to vector<1x128xf32>
    %10 = vector.extract_strided_slice %2 {offsets = [7, 0], sizes = [1, 32], strides = [1, 1]} : vector<8x128xf32> to vector<1x32xf32>
    %11 = vector.extract_strided_slice %2 {offsets = [7, 32], sizes = [1, 32], strides = [1, 1]} : vector<8x128xf32> to vector<1x32xf32>
    %c0_5 = arith.constant 0 : index
    %c0_6 = arith.constant 0 : index
    %12 = vector.load %arg2[%c0_5, %c0_6] : memref<128x192xbf16, #tpu.memory_space<vmem>>, vector<32x192xbf16>
    %c32 = arith.constant 32 : index
    %c0_7 = arith.constant 0 : index
    %13 = vector.load %arg2[%c32, %c0_7] : memref<128x192xbf16, #tpu.memory_space<vmem>>, vector<32x192xbf16>
    %14 = vector.extract_strided_slice %13 {offsets = [0, 0], sizes = [32, 64], strides = [1, 1]} : vector<32x192xbf16> to vector<32x64xbf16>
    %c64 = arith.constant 64 : index
    %c0_8 = arith.constant 0 : index
    %15 = vector.load %arg2[%c64, %c0_8] : memref<128x192xbf16, #tpu.memory_space<vmem>>, vector<64x192xbf16>
    %16 = vector.extract_strided_slice %15 {offsets = [0, 0], sizes = [64, 32], strides = [1, 1]} : vector<64x192xbf16> to vector<64x32xbf16>
    %cst = arith.constant 0.000000e+00 : f32
    %17 = vector.broadcast %cst : f32 to vector<2x8xf32>
    %18 = arith.cmpf oeq, %1, %17 : vector<2x8xf32>
    %cst_9 = arith.constant -1.000000e+09 : f32
    %cst_10 = arith.constant 0.000000e+00 : f32
    %19 = vector.broadcast %cst_9 : f32 to vector<2x8xf32>
    %20 = vector.broadcast %cst_10 : f32 to vector<2x8xf32>
    %21 = arith.select %18, %19, %20 : vector<2x8xi1>, vector<2x8xf32>
    %cst_11 = arith.constant dense<0.000000e+00> : vector<16xf32>
    %22 = vector.multi_reduction <add>, %0, %cst_11 [1] : vector<16x32xf32> to vector<16xf32>
    %23 = vector.shape_cast %22 : vector<16xf32> to vector<16x1xf32>
    %cst_12 = arith.constant 3.200000e+01 : f32
    %24 = vector.broadcast %cst_12 : f32 to vector<16x1xf32>
    %25 = arith.divf %23, %24 : vector<16x1xf32>
    %26 = vector.broadcast %25 : vector<16x1xf32> to vector<16x32xf32>
    %27 = arith.subf %0, %26 : vector<16x32xf32>
    %28 = arith.mulf %27, %27 : vector<16x32xf32>
    %cst_13 = arith.constant dense<0.000000e+00> : vector<16xf32>
    %29 = vector.multi_reduction <add>, %28, %cst_13 [1] : vector<16x32xf32> to vector<16xf32>
    %30 = vector.shape_cast %29 : vector<16xf32> to vector<16x1xf32>
    %cst_14 = arith.constant 3.200000e+01 : f32
    %31 = vector.broadcast %cst_14 : f32 to vector<16x1xf32>
    %32 = arith.divf %30, %31 : vector<16x1xf32>
    %33 = vector.broadcast %25 : vector<16x1xf32> to vector<16x32xf32>
    %34 = arith.subf %0, %33 : vector<16x32xf32>
    %cst_15 = arith.constant 9.99999974E-6 : f32
    %35 = vector.broadcast %cst_15 : f32 to vector<16x1xf32>
    %36 = arith.addf %32, %35 : vector<16x1xf32>
    %37 = math.rsqrt %36 : vector<16x1xf32>
    %38 = vector.broadcast %37 : vector<16x1xf32> to vector<16x32xf32>
    %39 = arith.mulf %34, %38 : vector<16x32xf32>
    %40 = vector.broadcast %3 : vector<1x32xf32> to vector<16x32xf32>
    %41 = arith.mulf %39, %40 : vector<16x32xf32>
    %42 = vector.broadcast %4 : vector<1x32xf32> to vector<16x32xf32>
    %43 = arith.addf %41, %42 : vector<16x32xf32>
    %44 = arith.truncf %43 : vector<16x32xf32> to vector<16x32xbf16>
    %cst_16 = arith.constant dense<0.000000e+00> : vector<16x192xf32>
    %45 = tpu.matmul %44, %12, %cst_16 {dimension_numbers = #tpu.dot_dimension_numbers<[1], [0], [0], [1], [0, 0, 1, 1], [], []>} : vector<16x32xbf16>, vector<32x192xbf16>, vector<16x192xf32> -> vector<16x192xf32>
    %46 = vector.extract_strided_slice %45 {offsets = [0, 0], sizes = [16, 64], strides = [1, 1]} : vector<16x192xf32> to vector<16x64xf32>
    %47 = vector.broadcast %7 : vector<1x64xf32> to vector<16x64xf32>
    %48 = arith.addf %46, %47 : vector<16x64xf32>
    %49 = vector.extract_strided_slice %45 {offsets = [0, 64], sizes = [16, 128], strides = [1, 1]} : vector<16x192xf32> to vector<16x128xf32>
    %50 = vector.broadcast %9 : vector<1x128xf32> to vector<16x128xf32>
    %51 = arith.addf %49, %50 : vector<16x128xf32>
    %52 = arith.truncf %48 : vector<16x64xf32> to vector<16x64xbf16>
    %53 = arith.truncf %51 : vector<16x128xf32> to vector<16x128xbf16>
    %54 = vector.extract_strided_slice %21 {offsets = [0, 0], sizes = [1, 8], strides = [1, 1]} : vector<2x8xf32> to vector<1x8xf32>
    %cst_17 = arith.constant 0.000000e+00 : f32
    %55 = vector.broadcast %cst_17 : f32 to vector<8x32xf32>
    %56 = vector.extract_strided_slice %52 {offsets = [0, 0], sizes = [8, 8], strides = [1, 1]} : vector<16x64xbf16> to vector<8x8xbf16>
    %57 = vector.extract_strided_slice %52 {offsets = [0, 32], sizes = [8, 8], strides = [1, 1]} : vector<16x64xbf16> to vector<8x8xbf16>
    %cst_18 = arith.constant dense<0.000000e+00> : vector<8x8xf32>
    %58 = tpu.matmul %56, %57, %cst_18 {dimension_numbers = #tpu.dot_dimension_numbers<[1], [1], [0], [0], [0, 0, 1, 0], [], []>} : vector<8x8xbf16>, vector<8x8xbf16>, vector<8x8xf32> -> vector<8x8xf32>
    %59 = vector.broadcast %54 : vector<1x8xf32> to vector<8x8xf32>
    %60 = arith.addf %58, %59 : vector<8x8xf32>
    %cst_19 = arith.constant dense<0xFF800000> : vector<8xf32>
    %61 = vector.multi_reduction <maximumf>, %60, %cst_19 [1] : vector<8x8xf32> to vector<8xf32>
    %62 = vector.shape_cast %61 : vector<8xf32> to vector<8x1xf32>
    %63 = vector.broadcast %62 : vector<8x1xf32> to vector<8x8xf32>
    %64 = arith.subf %60, %63 : vector<8x8xf32>
    %65 = math.exp %64 : vector<8x8xf32>
    %cst_20 = arith.constant dense<0.000000e+00> : vector<8xf32>
    %66 = vector.multi_reduction <add>, %65, %cst_20 [1] : vector<8x8xf32> to vector<8xf32>
    %67 = vector.shape_cast %66 : vector<8xf32> to vector<8x1xf32>
    %68 = tpu.reciprocal %67 {approx = true} : vector<8x1xf32> -> vector<8x1xf32>
    %69 = vector.broadcast %68 : vector<8x1xf32> to vector<8x8xf32>
    %70 = arith.mulf %65, %69 : vector<8x8xf32>
    %71 = arith.truncf %70 : vector<8x8xf32> to vector<8x8xbf16>
    %72 = vector.extract_strided_slice %53 {offsets = [0, 0], sizes = [8, 32], strides = [1, 1]} : vector<16x128xbf16> to vector<8x32xbf16>
    %cst_21 = arith.constant dense<0.000000e+00> : vector<8x32xf32>
    %73 = tpu.matmul %71, %72, %cst_21 {dimension_numbers = #tpu.dot_dimension_numbers<[1], [0], [0], [1], [0, 0, 1, 1], [], []>} : vector<8x8xbf16>, vector<8x32xbf16>, vector<8x32xf32> -> vector<8x32xf32>
    %74 = arith.addf %55, %73 : vector<8x32xf32>
    %75 = vector.extract_strided_slice %52 {offsets = [0, 8], sizes = [8, 8], strides = [1, 1]} : vector<16x64xbf16> to vector<8x8xbf16>
    %76 = vector.extract_strided_slice %52 {offsets = [0, 40], sizes = [8, 8], strides = [1, 1]} : vector<16x64xbf16> to vector<8x8xbf16>
    %cst_22 = arith.constant dense<0.000000e+00> : vector<8x8xf32>
    %77 = tpu.matmul %75, %76, %cst_22 {dimension_numbers = #tpu.dot_dimension_numbers<[1], [1], [0], [0], [0, 0, 1, 0], [], []>} : vector<8x8xbf16>, vector<8x8xbf16>, vector<8x8xf32> -> vector<8x8xf32>
    %78 = vector.broadcast %54 : vector<1x8xf32> to vector<8x8xf32>
    %79 = arith.addf %77, %78 : vector<8x8xf32>
    %cst_23 = arith.constant dense<0xFF800000> : vector<8xf32>
    %80 = vector.multi_reduction <maximumf>, %79, %cst_23 [1] : vector<8x8xf32> to vector<8xf32>
    %81 = vector.shape_cast %80 : vector<8xf32> to vector<8x1xf32>
    %82 = vector.broadcast %81 : vector<8x1xf32> to vector<8x8xf32>
    %83 = arith.subf %79, %82 : vector<8x8xf32>
    %84 = math.exp %83 : vector<8x8xf32>
    %cst_24 = arith.constant dense<0.000000e+00> : vector<8xf32>
    %85 = vector.multi_reduction <add>, %84, %cst_24 [1] : vector<8x8xf32> to vector<8xf32>
    %86 = vector.shape_cast %85 : vector<8xf32> to vector<8x1xf32>
    %87 = tpu.reciprocal %86 {approx = true} : vector<8x1xf32> -> vector<8x1xf32>
    %88 = vector.broadcast %87 : vector<8x1xf32> to vector<8x8xf32>
    %89 = arith.mulf %84, %88 : vector<8x8xf32>
    %90 = arith.truncf %89 : vector<8x8xf32> to vector<8x8xbf16>
    %91 = vector.extract_strided_slice %53 {offsets = [0, 32], sizes = [8, 32], strides = [1, 1]} : vector<16x128xbf16> to vector<8x32xbf16>
    %cst_25 = arith.constant dense<0.000000e+00> : vector<8x32xf32>
    %92 = tpu.matmul %90, %91, %cst_25 {dimension_numbers = #tpu.dot_dimension_numbers<[1], [0], [0], [1], [0, 0, 1, 1], [], []>} : vector<8x8xbf16>, vector<8x32xbf16>, vector<8x32xf32> -> vector<8x32xf32>
    %93 = arith.addf %74, %92 : vector<8x32xf32>
    %94 = vector.extract_strided_slice %52 {offsets = [0, 16], sizes = [8, 8], strides = [1, 1]} : vector<16x64xbf16> to vector<8x8xbf16>
    %95 = vector.extract_strided_slice %52 {offsets = [0, 48], sizes = [8, 8], strides = [1, 1]} : vector<16x64xbf16> to vector<8x8xbf16>
    %cst_26 = arith.constant dense<0.000000e+00> : vector<8x8xf32>
    %96 = tpu.matmul %94, %95, %cst_26 {dimension_numbers = #tpu.dot_dimension_numbers<[1], [1], [0], [0], [0, 0, 1, 0], [], []>} : vector<8x8xbf16>, vector<8x8xbf16>, vector<8x8xf32> -> vector<8x8xf32>
    %97 = vector.broadcast %54 : vector<1x8xf32> to vector<8x8xf32>
    %98 = arith.addf %96, %97 : vector<8x8xf32>
    %cst_27 = arith.constant dense<0xFF800000> : vector<8xf32>
    %99 = vector.multi_reduction <maximumf>, %98, %cst_27 [1] : vector<8x8xf32> to vector<8xf32>
    %100 = vector.shape_cast %99 : vector<8xf32> to vector<8x1xf32>
    %101 = vector.broadcast %100 : vector<8x1xf32> to vector<8x8xf32>
    %102 = arith.subf %98, %101 : vector<8x8xf32>
    %103 = math.exp %102 : vector<8x8xf32>
    %cst_28 = arith.constant dense<0.000000e+00> : vector<8xf32>
    %104 = vector.multi_reduction <add>, %103, %cst_28 [1] : vector<8x8xf32> to vector<8xf32>
    %105 = vector.shape_cast %104 : vector<8xf32> to vector<8x1xf32>
    %106 = tpu.reciprocal %105 {approx = true} : vector<8x1xf32> -> vector<8x1xf32>
    %107 = vector.broadcast %106 : vector<8x1xf32> to vector<8x8xf32>
    %108 = arith.mulf %103, %107 : vector<8x8xf32>
    %109 = arith.truncf %108 : vector<8x8xf32> to vector<8x8xbf16>
    %110 = vector.extract_strided_slice %53 {offsets = [0, 64], sizes = [8, 32], strides = [1, 1]} : vector<16x128xbf16> to vector<8x32xbf16>
    %cst_29 = arith.constant dense<0.000000e+00> : vector<8x32xf32>
    %111 = tpu.matmul %109, %110, %cst_29 {dimension_numbers = #tpu.dot_dimension_numbers<[1], [0], [0], [1], [0, 0, 1, 1], [], []>} : vector<8x8xbf16>, vector<8x32xbf16>, vector<8x32xf32> -> vector<8x32xf32>
    %112 = arith.addf %93, %111 : vector<8x32xf32>
    %113 = vector.extract_strided_slice %52 {offsets = [0, 24], sizes = [8, 8], strides = [1, 1]} : vector<16x64xbf16> to vector<8x8xbf16>
    %114 = vector.extract_strided_slice %52 {offsets = [0, 56], sizes = [8, 8], strides = [1, 1]} : vector<16x64xbf16> to vector<8x8xbf16>
    %cst_30 = arith.constant dense<0.000000e+00> : vector<8x8xf32>
    %115 = tpu.matmul %113, %114, %cst_30 {dimension_numbers = #tpu.dot_dimension_numbers<[1], [1], [0], [0], [0, 0, 1, 0], [], []>} : vector<8x8xbf16>, vector<8x8xbf16>, vector<8x8xf32> -> vector<8x8xf32>
    %116 = vector.broadcast %54 : vector<1x8xf32> to vector<8x8xf32>
    %117 = arith.addf %115, %116 : vector<8x8xf32>
    %cst_31 = arith.constant dense<0xFF800000> : vector<8xf32>
    %118 = vector.multi_reduction <maximumf>, %117, %cst_31 [1] : vector<8x8xf32> to vector<8xf32>
    %119 = vector.shape_cast %118 : vector<8xf32> to vector<8x1xf32>
    %120 = vector.broadcast %119 : vector<8x1xf32> to vector<8x8xf32>
    %121 = arith.subf %117, %120 : vector<8x8xf32>
    %122 = math.exp %121 : vector<8x8xf32>
    %cst_32 = arith.constant dense<0.000000e+00> : vector<8xf32>
    %123 = vector.multi_reduction <add>, %122, %cst_32 [1] : vector<8x8xf32> to vector<8xf32>
    %124 = vector.shape_cast %123 : vector<8xf32> to vector<8x1xf32>
    %125 = tpu.reciprocal %124 {approx = true} : vector<8x1xf32> -> vector<8x1xf32>
    %126 = vector.broadcast %125 : vector<8x1xf32> to vector<8x8xf32>
    %127 = arith.mulf %122, %126 : vector<8x8xf32>
    %128 = arith.truncf %127 : vector<8x8xf32> to vector<8x8xbf16>
    %129 = vector.extract_strided_slice %53 {offsets = [0, 96], sizes = [8, 32], strides = [1, 1]} : vector<16x128xbf16> to vector<8x32xbf16>
    %cst_33 = arith.constant dense<0.000000e+00> : vector<8x32xf32>
    %130 = tpu.matmul %128, %129, %cst_33 {dimension_numbers = #tpu.dot_dimension_numbers<[1], [0], [0], [1], [0, 0, 1, 1], [], []>} : vector<8x8xbf16>, vector<8x32xbf16>, vector<8x32xf32> -> vector<8x32xf32>
    %131 = arith.addf %112, %130 : vector<8x32xf32>
    %132 = vector.extract_strided_slice %21 {offsets = [1, 0], sizes = [1, 8], strides = [1, 1]} : vector<2x8xf32> to vector<1x8xf32>
    %cst_34 = arith.constant 0.000000e+00 : f32
    %133 = vector.broadcast %cst_34 : f32 to vector<8x32xf32>
    %134 = vector.extract_strided_slice %52 {offsets = [8, 0], sizes = [8, 8], strides = [1, 1]} : vector<16x64xbf16> to vector<8x8xbf16>
    %135 = vector.extract_strided_slice %52 {offsets = [8, 32], sizes = [8, 8], strides = [1, 1]} : vector<16x64xbf16> to vector<8x8xbf16>
    %cst_35 = arith.constant dense<0.000000e+00> : vector<8x8xf32>
    %136 = tpu.matmul %134, %135, %cst_35 {dimension_numbers = #tpu.dot_dimension_numbers<[1], [1], [0], [0], [0, 0, 1, 0], [], []>} : vector<8x8xbf16>, vector<8x8xbf16>, vector<8x8xf32> -> vector<8x8xf32>
    %137 = vector.broadcast %132 : vector<1x8xf32> to vector<8x8xf32>
    %138 = arith.addf %136, %137 : vector<8x8xf32>
    %cst_36 = arith.constant dense<0xFF800000> : vector<8xf32>
    %139 = vector.multi_reduction <maximumf>, %138, %cst_36 [1] : vector<8x8xf32> to vector<8xf32>
    %140 = vector.shape_cast %139 : vector<8xf32> to vector<8x1xf32>
    %141 = vector.broadcast %140 : vector<8x1xf32> to vector<8x8xf32>
    %142 = arith.subf %138, %141 : vector<8x8xf32>
    %143 = math.exp %142 : vector<8x8xf32>
    %cst_37 = arith.constant dense<0.000000e+00> : vector<8xf32>
    %144 = vector.multi_reduction <add>, %143, %cst_37 [1] : vector<8x8xf32> to vector<8xf32>
    %145 = vector.shape_cast %144 : vector<8xf32> to vector<8x1xf32>
    %146 = tpu.reciprocal %145 {approx = true} : vector<8x1xf32> -> vector<8x1xf32>
    %147 = vector.broadcast %146 : vector<8x1xf32> to vector<8x8xf32>
    %148 = arith.mulf %143, %147 : vector<8x8xf32>
    %149 = arith.truncf %148 : vector<8x8xf32> to vector<8x8xbf16>
    %150 = vector.extract_strided_slice %53 {offsets = [8, 0], sizes = [8, 32], strides = [1, 1]} : vector<16x128xbf16> to vector<8x32xbf16>
    %cst_38 = arith.constant dense<0.000000e+00> : vector<8x32xf32>
    %151 = tpu.matmul %149, %150, %cst_38 {dimension_numbers = #tpu.dot_dimension_numbers<[1], [0], [0], [1], [0, 0, 1, 1], [], []>} : vector<8x8xbf16>, vector<8x32xbf16>, vector<8x32xf32> -> vector<8x32xf32>
    %152 = arith.addf %133, %151 : vector<8x32xf32>
    %153 = vector.extract_strided_slice %52 {offsets = [8, 8], sizes = [8, 8], strides = [1, 1]} : vector<16x64xbf16> to vector<8x8xbf16>
    %154 = vector.extract_strided_slice %52 {offsets = [8, 40], sizes = [8, 8], strides = [1, 1]} : vector<16x64xbf16> to vector<8x8xbf16>
    %cst_39 = arith.constant dense<0.000000e+00> : vector<8x8xf32>
    %155 = tpu.matmul %153, %154, %cst_39 {dimension_numbers = #tpu.dot_dimension_numbers<[1], [1], [0], [0], [0, 0, 1, 0], [], []>} : vector<8x8xbf16>, vector<8x8xbf16>, vector<8x8xf32> -> vector<8x8xf32>
    %156 = vector.broadcast %132 : vector<1x8xf32> to vector<8x8xf32>
    %157 = arith.addf %155, %156 : vector<8x8xf32>
    %cst_40 = arith.constant dense<0xFF800000> : vector<8xf32>
    %158 = vector.multi_reduction <maximumf>, %157, %cst_40 [1] : vector<8x8xf32> to vector<8xf32>
    %159 = vector.shape_cast %158 : vector<8xf32> to vector<8x1xf32>
    %160 = vector.broadcast %159 : vector<8x1xf32> to vector<8x8xf32>
    %161 = arith.subf %157, %160 : vector<8x8xf32>
    %162 = math.exp %161 : vector<8x8xf32>
    %cst_41 = arith.constant dense<0.000000e+00> : vector<8xf32>
    %163 = vector.multi_reduction <add>, %162, %cst_41 [1] : vector<8x8xf32> to vector<8xf32>
    %164 = vector.shape_cast %163 : vector<8xf32> to vector<8x1xf32>
    %165 = tpu.reciprocal %164 {approx = true} : vector<8x1xf32> -> vector<8x1xf32>
    %166 = vector.broadcast %165 : vector<8x1xf32> to vector<8x8xf32>
    %167 = arith.mulf %162, %166 : vector<8x8xf32>
    %168 = arith.truncf %167 : vector<8x8xf32> to vector<8x8xbf16>
    %169 = vector.extract_strided_slice %53 {offsets = [8, 32], sizes = [8, 32], strides = [1, 1]} : vector<16x128xbf16> to vector<8x32xbf16>
    %cst_42 = arith.constant dense<0.000000e+00> : vector<8x32xf32>
    %170 = tpu.matmul %168, %169, %cst_42 {dimension_numbers = #tpu.dot_dimension_numbers<[1], [0], [0], [1], [0, 0, 1, 1], [], []>} : vector<8x8xbf16>, vector<8x32xbf16>, vector<8x32xf32> -> vector<8x32xf32>
    %171 = arith.addf %152, %170 : vector<8x32xf32>
    %172 = vector.extract_strided_slice %52 {offsets = [8, 16], sizes = [8, 8], strides = [1, 1]} : vector<16x64xbf16> to vector<8x8xbf16>
    %173 = vector.extract_strided_slice %52 {offsets = [8, 48], sizes = [8, 8], strides = [1, 1]} : vector<16x64xbf16> to vector<8x8xbf16>
    %cst_43 = arith.constant dense<0.000000e+00> : vector<8x8xf32>
    %174 = tpu.matmul %172, %173, %cst_43 {dimension_numbers = #tpu.dot_dimension_numbers<[1], [1], [0], [0], [0, 0, 1, 0], [], []>} : vector<8x8xbf16>, vector<8x8xbf16>, vector<8x8xf32> -> vector<8x8xf32>
    %175 = vector.broadcast %132 : vector<1x8xf32> to vector<8x8xf32>
    %176 = arith.addf %174, %175 : vector<8x8xf32>
    %cst_44 = arith.constant dense<0xFF800000> : vector<8xf32>
    %177 = vector.multi_reduction <maximumf>, %176, %cst_44 [1] : vector<8x8xf32> to vector<8xf32>
    %178 = vector.shape_cast %177 : vector<8xf32> to vector<8x1xf32>
    %179 = vector.broadcast %178 : vector<8x1xf32> to vector<8x8xf32>
    %180 = arith.subf %176, %179 : vector<8x8xf32>
    %181 = math.exp %180 : vector<8x8xf32>
    %cst_45 = arith.constant dense<0.000000e+00> : vector<8xf32>
    %182 = vector.multi_reduction <add>, %181, %cst_45 [1] : vector<8x8xf32> to vector<8xf32>
    %183 = vector.shape_cast %182 : vector<8xf32> to vector<8x1xf32>
    %184 = tpu.reciprocal %183 {approx = true} : vector<8x1xf32> -> vector<8x1xf32>
    %185 = vector.broadcast %184 : vector<8x1xf32> to vector<8x8xf32>
    %186 = arith.mulf %181, %185 : vector<8x8xf32>
    %187 = arith.truncf %186 : vector<8x8xf32> to vector<8x8xbf16>
    %188 = vector.extract_strided_slice %53 {offsets = [8, 64], sizes = [8, 32], strides = [1, 1]} : vector<16x128xbf16> to vector<8x32xbf16>
    %cst_46 = arith.constant dense<0.000000e+00> : vector<8x32xf32>
    %189 = tpu.matmul %187, %188, %cst_46 {dimension_numbers = #tpu.dot_dimension_numbers<[1], [0], [0], [1], [0, 0, 1, 1], [], []>} : vector<8x8xbf16>, vector<8x32xbf16>, vector<8x32xf32> -> vector<8x32xf32>
    %190 = arith.addf %171, %189 : vector<8x32xf32>
    %191 = vector.extract_strided_slice %52 {offsets = [8, 24], sizes = [8, 8], strides = [1, 1]} : vector<16x64xbf16> to vector<8x8xbf16>
    %192 = vector.extract_strided_slice %52 {offsets = [8, 56], sizes = [8, 8], strides = [1, 1]} : vector<16x64xbf16> to vector<8x8xbf16>
    %cst_47 = arith.constant dense<0.000000e+00> : vector<8x8xf32>
    %193 = tpu.matmul %191, %192, %cst_47 {dimension_numbers = #tpu.dot_dimension_numbers<[1], [1], [0], [0], [0, 0, 1, 0], [], []>} : vector<8x8xbf16>, vector<8x8xbf16>, vector<8x8xf32> -> vector<8x8xf32>
    %194 = vector.broadcast %132 : vector<1x8xf32> to vector<8x8xf32>
    %195 = arith.addf %193, %194 : vector<8x8xf32>
    %cst_48 = arith.constant dense<0xFF800000> : vector<8xf32>
    %196 = vector.multi_reduction <maximumf>, %195, %cst_48 [1] : vector<8x8xf32> to vector<8xf32>
    %197 = vector.shape_cast %196 : vector<8xf32> to vector<8x1xf32>
    %198 = vector.broadcast %197 : vector<8x1xf32> to vector<8x8xf32>
    %199 = arith.subf %195, %198 : vector<8x8xf32>
    %200 = math.exp %199 : vector<8x8xf32>
    %cst_49 = arith.constant dense<0.000000e+00> : vector<8xf32>
    %201 = vector.multi_reduction <add>, %200, %cst_49 [1] : vector<8x8xf32> to vector<8xf32>
    %202 = vector.shape_cast %201 : vector<8xf32> to vector<8x1xf32>
    %203 = tpu.reciprocal %202 {approx = true} : vector<8x1xf32> -> vector<8x1xf32>
    %204 = vector.broadcast %203 : vector<8x1xf32> to vector<8x8xf32>
    %205 = arith.mulf %200, %204 : vector<8x8xf32>
    %206 = arith.truncf %205 : vector<8x8xf32> to vector<8x8xbf16>
    %207 = vector.extract_strided_slice %53 {offsets = [8, 96], sizes = [8, 32], strides = [1, 1]} : vector<16x128xbf16> to vector<8x32xbf16>
    %cst_50 = arith.constant dense<0.000000e+00> : vector<8x32xf32>
    %208 = tpu.matmul %206, %207, %cst_50 {dimension_numbers = #tpu.dot_dimension_numbers<[1], [0], [0], [1], [0, 0, 1, 1], [], []>} : vector<8x8xbf16>, vector<8x32xbf16>, vector<8x32xf32> -> vector<8x32xf32>
    %209 = arith.addf %190, %208 : vector<8x32xf32>
    %210 = tpu.concatenate %131, %209 in 0 : vector<8x32xf32>, vector<8x32xf32> -> vector<16x32xf32>
    %211 = vector.broadcast %10 : vector<1x32xf32> to vector<16x32xf32>
    %212 = arith.addf %210, %211 : vector<16x32xf32>
    %213 = arith.addf %0, %212 : vector<16x32xf32>
    %cst_51 = arith.constant dense<0.000000e+00> : vector<16xf32>
    %214 = vector.multi_reduction <add>, %213, %cst_51 [1] : vector<16x32xf32> to vector<16xf32>
    %215 = vector.shape_cast %214 : vector<16xf32> to vector<16x1xf32>
    %cst_52 = arith.constant 3.200000e+01 : f32
    %216 = vector.broadcast %cst_52 : f32 to vector<16x1xf32>
    %217 = arith.divf %215, %216 : vector<16x1xf32>
    %218 = vector.broadcast %217 : vector<16x1xf32> to vector<16x32xf32>
    %219 = arith.subf %213, %218 : vector<16x32xf32>
    %220 = arith.mulf %219, %219 : vector<16x32xf32>
    %cst_53 = arith.constant dense<0.000000e+00> : vector<16xf32>
    %221 = vector.multi_reduction <add>, %220, %cst_53 [1] : vector<16x32xf32> to vector<16xf32>
    %222 = vector.shape_cast %221 : vector<16xf32> to vector<16x1xf32>
    %cst_54 = arith.constant 3.200000e+01 : f32
    %223 = vector.broadcast %cst_54 : f32 to vector<16x1xf32>
    %224 = arith.divf %222, %223 : vector<16x1xf32>
    %225 = vector.broadcast %217 : vector<16x1xf32> to vector<16x32xf32>
    %226 = arith.subf %213, %225 : vector<16x32xf32>
    %cst_55 = arith.constant 9.99999974E-6 : f32
    %227 = vector.broadcast %cst_55 : f32 to vector<16x1xf32>
    %228 = arith.addf %224, %227 : vector<16x1xf32>
    %229 = math.rsqrt %228 : vector<16x1xf32>
    %230 = vector.broadcast %229 : vector<16x1xf32> to vector<16x32xf32>
    %231 = arith.mulf %226, %230 : vector<16x32xf32>
    %232 = vector.broadcast %5 : vector<1x32xf32> to vector<16x32xf32>
    %233 = arith.mulf %231, %232 : vector<16x32xf32>
    %234 = vector.broadcast %6 : vector<1x32xf32> to vector<16x32xf32>
    %235 = arith.addf %233, %234 : vector<16x32xf32>
    %236 = arith.truncf %235 : vector<16x32xf32> to vector<16x32xbf16>
    %cst_56 = arith.constant dense<0.000000e+00> : vector<16x64xf32>
    %237 = tpu.matmul %236, %14, %cst_56 {dimension_numbers = #tpu.dot_dimension_numbers<[1], [0], [0], [1], [0, 0, 1, 1], [], []>} : vector<16x32xbf16>, vector<32x64xbf16>, vector<16x64xf32> -> vector<16x64xf32>
    %238 = vector.broadcast %8 : vector<1x64xf32> to vector<16x64xf32>
    %239 = arith.addf %237, %238 : vector<16x64xf32>
    %cst_57 = arith.constant 0.000000e+00 : f32
    %240 = vector.broadcast %cst_57 : f32 to vector<16x64xf32>
    %241 = arith.maximumf %239, %240 : vector<16x64xf32>
    %242 = arith.truncf %241 : vector<16x64xf32> to vector<16x64xbf16>
    %cst_58 = arith.constant dense<0.000000e+00> : vector<16x32xf32>
    %243 = tpu.matmul %242, %16, %cst_58 {dimension_numbers = #tpu.dot_dimension_numbers<[1], [0], [0], [1], [0, 0, 1, 1], [], []>} : vector<16x64xbf16>, vector<64x32xbf16>, vector<16x32xf32> -> vector<16x32xf32>
    %244 = vector.broadcast %11 : vector<1x32xf32> to vector<16x32xf32>
    %245 = arith.addf %243, %244 : vector<16x32xf32>
    %246 = arith.addf %213, %245 : vector<16x32xf32>
    %c0_59 = arith.constant 0 : index
    %c0_60 = arith.constant 0 : index
    %247 = vector.load %arg4[%c0_59, %c0_60] : memref<16x32xf32, #tpu.memory_space<vmem>>, vector<16x32xf32>
    tpu.vector_store %arg4[%c0_59, %c0_60], %246 {strides = array<i32>} : memref<16x32xf32, #tpu.memory_space<vmem>>, vector<16x32xf32>,
    return
  }
}

</mosaic_0001>

<llo_original>
// kernel: tpu_custom_call.1
$region0: #{tpu_custom_call.1}
  #allocation0 [shape = 'u32[]', space=smem, size = 0x4, offset = 0x4, fixed_abs, tag = 'smem constant byte address 0x4 - core index']
  #allocation1 [shape = 'u32[144,128]{1,0:T(1,128)}', space=vmem, size = 0x12000, scoped, tag = 'internal scratch']
  %s0 = inlined_call_operand.vmem [shape: f32[16,32], index: 0, kind: input, shape index: {}]
  %s1 = inlined_call_operand.vmem [shape: f32[2,8], index: 1, kind: input, shape index: {}]
  %s2 = inlined_call_operand.vmem [shape: bf16[128,192], index: 2, kind: input, shape index: {}]
  %s3 = inlined_call_operand.vmem [shape: f32[8,128], index: 3, kind: input, shape index: {}]
  %s4 = inlined_call_operand.hbm [shape: f32[16,32], index: 4, kind: output, shape index: {}]
  %s5 = sld [smem:[#allocation0]]
  $region26: #{tpu_custom_call.1} parent=0
    _
  %s7 = ssub.s32 1, %s5
  %s8 = scalar_select 0, %s7, %s5
  $region1: #{tpu_custom_call.1} parent=0
    #allocation2 [shape = 'u8[8192]{0}', space=vmem, size = 0x2000, scoped, tag = 'output window, operand 0, single buffered']
    #allocation3 [shape = 's32[1]{0}', space=sflag, size = 0x4, scoped, tag = 'scoped memory for tpu_custom_call.1']
    %9 = vsyncpa [#allocation3], 0
    // Predicated region
    $region2: #{tpu_custom_call.1} parent=1 // pred_check
      _
    $region3: #{tpu_custom_call.1} parent=1 // pred_check_branch
      %11 = sbr.rel (0) target = $region5
    $region4: #{tpu_custom_call.1} parent=1 // pred_region
      _
    $region5: #{tpu_custom_call.1} parent=1 // pred_fallthru
      _
    // Predicated region
    $region6: #{tpu_custom_call.1} parent=1 // pred_check
      _
    $region7: #{tpu_custom_call.1} parent=1 // pred_check_branch
      %13 = sbr.rel (0) target = $region9
    $region8: #{tpu_custom_call.1} parent=1 // pred_region
      _
    $region9: #{tpu_custom_call.1} parent=1 // pred_fallthru
      _
    // Predicated region
    $region10: #{tpu_custom_call.1} parent=1 // pred_check
      _
    $region11: #{tpu_custom_call.1} parent=1 // pred_check_branch
      %15 = sbr.rel (0) target = $region13
    $region12: #{tpu_custom_call.1} parent=1 // pred_region
      _
    $region13: #{tpu_custom_call.1} parent=1 // pred_fallthru
      _
    // Predicated region
    $region14: #{tpu_custom_call.1} parent=1 // pred_check
      _
    $region15: #{tpu_custom_call.1} parent=1 // pred_check_branch
      %17 = sbr.rel (0) target = $region17
    $region16: #{tpu_custom_call.1} parent=1 // pred_region
      _
    $region17: #{tpu_custom_call.1} parent=1 // pred_fallthru
      _
    %v19 = vld [vmem:[%s0] sm:$0xff]
    %v20 = vld [vmem:[%s0 + $0x8] sm:$0xff]
    %v21 = vld [vmem:[%s1] sm:$0x3]
    %v22 = vld [vmem:[%s3] sm:$0xff]
    %v23 = vld [vmem:[%s2] sm:$0xff]
    %v24 = vld [vmem:[%s2 + $0x8] sm:$0xff]
    %v25 = vld [vmem:[%s2 + $0x10] sm:$0xff]
    %v26 = vld [vmem:[%s2 + $0x18] sm:$0xff]
    %v27 = vld [vmem:[%s2 + $0x20] sm:$0xff]
    %v28 = vld [vmem:[%s2 + $0x28] sm:$0xff]
    %v29 = vld [vmem:[%s2 + $0x30] sm:$0xff]
    %v30 = vld [vmem:[%s2 + $0x38] sm:$0xff]
    %v31 = vld [vmem:[%s2 + $0x40] sm:$0xff]
    %v32 = vld [vmem:[%s2 + $0x48] sm:$0xff]
    %v33 = vld [vmem:[%s2 + $0x50] sm:$0xff]
    %v34 = vld [vmem:[%s2 + $0x58] sm:$0xff]
    %v35 = vld [vmem:[%s2 + $0x60] sm:$0xff]
    %v36 = vld [vmem:[%s2 + $0x68] sm:$0xff]
    %v37 = vld [vmem:[%s2 + $0x70] sm:$0xff]
    %v38 = vld [vmem:[%s2 + $0x78] sm:$0xff]
    %vm39 = vcmp.eq.f32.partialorder %v21, 0.0
    %v40 = vsel %vm39, -1e+09, 0.0
    %vm41 = vcmask 261120
    %v42 = vsel %vm41, %v19, 0.0
    %43 = vadd.xlane.f32.xlu0 %v42
    %v44 = vpop.xlane.xlu0 %43
    %v45 = vsel %vm41, %v20, 0.0
    %46 = vadd.xlane.f32.xlu0 %v45
    %v47 = vpop.xlane.xlu0 %46
    %v48 = vrcp.pop 32.0
    %v49 = vmul.f32 %v44, %v48
    %v50 = vmul.f32 %v47, %v48
    %v51 = vsub.f32 %v19, %v49
    %v52 = vsub.f32 %v20, %v50
    %v53 = vmul.f32 %v51, %v51
    %v54 = vmul.f32 %v52, %v52
    %v55 = vsel %vm41, %v53, 0.0
    %56 = vadd.xlane.f32.xlu0 %v55
    %v57 = vpop.xlane.xlu0 %56
    %v58 = vsel %vm41, %v54, 0.0
    %59 = vadd.xlane.f32.xlu0 %v58
    %v60 = vpop.xlane.xlu0 %59
    %v61 = vmul.f32 %v57, %v48
    %v62 = vmul.f32 %v60, %v48
    %v63 = vadd.f32 %v61, 1e-05
    %v64 = vadd.f32 %v62, 1e-05
    %v65 = vrsqrt.pop %v63
    %v66 = vrsqrt.pop %v64
    %v67 = vmul.f32 %v51, %v65
    %v68 = vmul.f32 %v52, %v66
    %v69 = vlaneseq
    %v70 = vshrl.u32 %v69, 7
    %v71 = vsub.s32 0, %v70
    %v72 = vrot.slane %v22, %v71
    %v73 = vmul.f32 %v67, %v72
    %v74 = vmul.f32 %v68, %v72
    %v75 = vlaneseq
    %v76 = vshrl.u32 %v75, 7
    %v77 = vsub.s32 1, %v76
    %v78 = vrot.slane %v22, %v77
    %v79 = vadd.f32 %v73, %v78
    %v80 = vadd.f32 %v74, %v78
    %v81 = vpack.c.bf16 %v80, %v79
    %v86 = vunpack.c.l.b16 %v23
    %v87 = vunpack.c.h.b16 %v23
    %v88 = vunpack.c.l.b16 %v24
    %v89 = vunpack.c.h.b16 %v24
    %v90 = vunpack.c.l.b16 %v25
    %v91 = vunpack.c.h.b16 %v25
    %v92 = vunpack.c.l.b16 %v26
    %v93 = vunpack.c.h.b16 %v26
    %v94 = vpack.c.b16 %v88, %v86
    %v95 = vpack.c.b16 %v89, %v87
    %v96 = vpack.c.b16 %v92, %v90
    %v97 = vpack.c.b16 %v93, %v91
    %v103 = vsel %vm41, %v81, 0
    %105 = vmatprep.subr.bf16.mxu0 %v95
    %106 = vmatpush1.bf16.msra.mxu0 %v94
    %107 = vmatprep.subr.bf16.mxu0 %v97
    %108 = vmatpush1.bf16.msra.mxu0 %v96
    %109 = vmatprep.subr.bf16.mxu0 0
    %110 = vmatpush1.bf16.msra.mxu0 0
    %111 = vmatprep.subr.bf16.mxu0 0
    %112 = vmatpush1.bf16.msra.mxu0 0
    %113 = vmatprep.subr.bf16.mxu0 0
    %114 = vmatpush1.bf16.msra.mxu0 0
    %115 = vmatprep.subr.bf16.mxu0 0
    %116 = vmatpush1.bf16.msra.mxu0 0
    %117 = vmatprep.subr.bf16.mxu0 0
    %118 = vmatpush1.bf16.msra.mxu0 0
    %119 = vmatprep.subr.bf16.mxu0 0
    %120 = vmatpush1.bf16.msra.mxu0 0
    %121 = vmatprep.subr.bf16.mxu0 0
    %122 = vmatpush1.bf16.msra.mxu0 0
    %123 = vmatprep.subr.bf16.mxu0 0
    %124 = vmatpush1.bf16.msra.mxu0 0
    %125 = vmatprep.subr.bf16.mxu0 0
    %126 = vmatpush1.bf16.msra.mxu0 0
    %127 = vmatprep.subr.bf16.mxu0 0
    %128 = vmatpush1.bf16.msra.mxu0 0
    %129 = vmatprep.subr.bf16.mxu0 0
    %130 = vmatpush1.bf16.msra.mxu0 0
    %131 = vmatprep.subr.bf16.mxu0 0
    %132 = vmatpush1.bf16.msra.mxu0 0
    %133 = vmatprep.subr.bf16.mxu0 0
    %134 = vmatpush1.bf16.msra.mxu0 0
    %135 = vmatprep.subr.bf16.mxu0 0
    %136 = vmatpush1.bf16.msra.mxu0 0
    %137 = vmatprep.mubr.bf16.mxu0 0
    %138 = vmatmul.mubr.bf16.gmra.mrb[0].mxu0 %v103
    %v139 = vpop.f32.mrb[0].mxu0
    %v140 = vadd.f32 0.0, %v139
    %v141 = vpop.f32.mrb[0].mxu0
    %v142 = vadd.f32 0.0, %v141
    %v143 = vpop.f32.mrb[0].mxu0
    %v144 = vadd.f32 0.0, %v143
    %v145 = vpop.f32.mrb[0].mxu0
    %v146 = vadd.f32 0.0, %v145
    %147 = vdwg.mxu0
    %v148 = vlaneseq
    %v149 = vshrl.u32 %v148, 7
    %v150 = vsub.s32 4, %v149
    %v151 = vrot.slane %v22, %v150
    %v152 = vadd.f32 %v140, %v151
    %v153 = vadd.f32 %v144, %v151
    %v154 = vlaneseq
    %v155 = vshrl.u32 %v154, 7
    %v156 = vsub.s32 6, %v155
    %v157 = vrot.slane %v22, %v156
    %159 = vrot.lane.b32.xlu0 %v157, 64
    %v160 = vpop.permute.xlu0 %159
    %v162 = vadd.f32 %v140, %v160
    %v163 = vadd.f32 %v142, %v160
    %v164 = vadd.f32 %v144, %v160
    %v165 = vadd.f32 %v146, %v160
    %v166 = vpack.c.bf16 %v153, %v152
    %v167 = vpack.c.bf16 %v164, %v162
    %v168 = vpack.c.bf16 %v165, %v163
    %v169 = vlaneseq
    %v170 = vshrl.u32 %v169, 7
    %v171 = vsub.s32 0, %v170
    %v172 = vrot.slane %v40, %v171
    %174 = vrot.lane.b32.xlu0 %v166, 96
    %v175 = vpop.permute.xlu0 %174
    %vm176 = vcmask 64512
    %v178 = vsel %vm176, %v166, 0
    %v181 = vsel %vm176, %v175, 0
    %183 = vmatprep.subr.bf16.mxu0 0
    %184 = vmatpush1.bf16.xpose.msra.mxu0 %v181
    %185 = vmatprep.subr.bf16.mxu0 0
    %186 = vmatpush1.bf16.xpose.msra.mxu0 0
    %187 = vmatprep.subr.bf16.mxu0 0
    %188 = vmatpush1.bf16.xpose.msra.mxu0 0
    %189 = vmatprep.subr.bf16.mxu0 0
    %190 = vmatpush1.bf16.xpose.msra.mxu0 0
    %191 = vmatprep.subr.bf16.mxu0 0
    %192 = vmatpush1.bf16.xpose.msra.mxu0 0
    %193 = vmatprep.subr.bf16.mxu0 0
    %194 = vmatpush1.bf16.xpose.msra.mxu0 0
    %195 = vmatprep.subr.bf16.mxu0 0
    %196 = vmatpush1.bf16.xpose.msra.mxu0 0
    %197 = vmatprep.subr.bf16.mxu0 0
    %198 = vmatpush1.bf16.xpose.msra.mxu0 0
    %199 = vmatprep.subr.bf16.mxu0 0
    %200 = vmatpush1.bf16.xpose.msra.mxu0 0
    %201 = vmatprep.subr.bf16.mxu0 0
    %202 = vmatpush1.bf16.xpose.msra.mxu0 0
    %203 = vmatprep.subr.bf16.mxu0 0
    %204 = vmatpush1.bf16.xpose.msra.mxu0 0
    %205 = vmatprep.subr.bf16.mxu0 0
    %206 = vmatpush1.bf16.xpose.msra.mxu0 0
    %207 = vmatprep.subr.bf16.mxu0 0
    %208 = vmatpush1.bf16.xpose.msra.mxu0 0
    %209 = vmatprep.subr.bf16.mxu0 0
    %210 = vmatpush1.bf16.xpose.msra.mxu0 0
    %211 = vmatprep.subr.bf16.mxu0 0
    %212 = vmatpush1.bf16.xpose.msra.mxu0 0
    %213 = vmatprep.subr.bf16.mxu0 0
    %214 = vmatpush1.bf16.xpose.msra.mxu0 0
    %215 = vmatprep.mubr.bf16.mxu0 0
    %216 = vmatmul.mubr.bf16.gmra.mrb[0].mxu0 %v178
    %v217 = vpop.f32.mrb[0].mxu0
    %v218 = vadd.f32 %v172, %v217
    %v219 = vpop.f32.mrb[0].mxu0
    %v220 = vpop.f32.mrb[0].mxu0
    %v221 = vpop.f32.mrb[0].mxu0
    %222 = vdwg.mxu0
    %v223 = vsel %vm176, %v218, -inf
    %224 = vmax.xlane.f32.xlu0 %v223
    %v225 = vpop.xlane.xlu0 %224
    %v226 = vsub.f32 %v218, %v225
    %v227 = vmul.f32 %v226, 1.442695
    %v228 = vpow.pop %v227
    %v229 = vsel %vm176, %v228, 0.0
    %230 = vadd.xlane.f32.xlu0 %v229
    %v231 = vpop.xlane.xlu0 %230
    %v232 = vrcp.pop %v231
    %v233 = vmul.f32 %v228, %v232
    %v234 = vpack.c.bf16 %v233, %v233
    %235 = vrot.lane.b32.xlu0 %v166, 120
    %v236 = vpop.permute.xlu0 %235
    %237 = vrot.lane.b32.xlu0 %v166, 88
    %v238 = vpop.permute.xlu0 %237
    %v240 = vsel %vm176, %v236, 0
    %v243 = vsel %vm176, %v238, 0
    %245 = vmatprep.subr.bf16.mxu0 0
    %246 = vmatpush1.bf16.xpose.msra.mxu0 %v243
    %247 = vmatprep.subr.bf16.mxu0 0
    %248 = vmatpush1.bf16.xpose.msra.mxu0 0
    %249 = vmatprep.subr.bf16.mxu0 0
    %250 = vmatpush1.bf16.xpose.msra.mxu0 0
    %251 = vmatprep.subr.bf16.mxu0 0
    %252 = vmatpush1.bf16.xpose.msra.mxu0 0
    %253 = vmatprep.subr.bf16.mxu0 0
    %254 = vmatpush1.bf16.xpose.msra.mxu0 0
    %255 = vmatprep.subr.bf16.mxu0 0
    %256 = vmatpush1.bf16.xpose.msra.mxu0 0
    %257 = vmatprep.subr.bf16.mxu0 0
    %258 = vmatpush1.bf16.xpose.msra.mxu0 0
    %259 = vmatprep.subr.bf16.mxu0 0
    %260 = vmatpush1.bf16.xpose.msra.mxu0 0
    %261 = vmatprep.subr.bf16.mxu0 0
    %262 = vmatpush1.bf16.xpose.msra.mxu0 0
    %263 = vmatprep.subr.bf16.mxu0 0
    %264 = vmatpush1.bf16.xpose.msra.mxu0 0
    %265 = vmatprep.subr.bf16.mxu0 0
    %266 = vmatpush1.bf16.xpose.msra.mxu0 0
    %267 = vmatprep.subr.bf16.mxu0 0
    %268 = vmatpush1.bf16.xpose.msra.mxu0 0
    %269 = vmatprep.subr.bf16.mxu0 0
    %270 = vmatpush1.bf16.xpose.msra.mxu0 0
    %271 = vmatprep.subr.bf16.mxu0 0
    %272 = vmatpush1.bf16.xpose.msra.mxu0 0
    %273 = vmatprep.subr.bf16.mxu0 0
    %274 = vmatpush1.bf16.xpose.msra.mxu0 0
    %275 = vmatprep.subr.bf16.mxu0 0
    %276 = vmatpush1.bf16.xpose.msra.mxu0 0
    %277 = vmatprep.mubr.bf16.mxu0 0
    %278 = vmatmul.mubr.bf16.gmra.mrb[0].mxu0 %v240
    %v279 = vpop.f32.mrb[0].mxu0
    %v280 = vadd.f32 %v172, %v279
    %v281 = vpop.f32.mrb[0].mxu0
    %v282 = vpop.f32.mrb[0].mxu0
    %v283 = vpop.f32.mrb[0].mxu0
    %284 = vdwg.mxu0
    %v285 = vsel %vm176, %v280, -inf
    %286 = vmax.xlane.f32.xlu0 %v285
    %v287 = vpop.xlane.xlu0 %286
    %v288 = vsub.f32 %v280, %v287
    %v289 = vmul.f32 %v288, 1.442695
    %v290 = vpow.pop %v289
    %v291 = vsel %vm176, %v290, 0.0
    %292 = vadd.xlane.f32.xlu0 %v291
    %v293 = vpop.xlane.xlu0 %292
    %v294 = vrcp.pop %v293
    %v295 = vmul.f32 %v290, %v294
    %v296 = vpack.c.bf16 %v295, %v295
    %298 = vrot.lane.b32.xlu0 %v167, 32
    %v299 = vpop.permute.xlu0 %298
    %v301 = vsel %vm176, %v296, 0
    %vm303 = vcmask 1043456
    %v305 = vsel %vm303, %v299, 0
    %307 = vmatprep.subr.bf16.mxu0 0
    %308 = vmatpush1.bf16.msra.mxu0 %v305
    %309 = vmatprep.subr.bf16.mxu0 0
    %310 = vmatpush1.bf16.msra.mxu0 0
    %311 = vmatprep.subr.bf16.mxu0 0
    %312 = vmatpush1.bf16.msra.mxu0 0
    %313 = vmatprep.subr.bf16.mxu0 0
    %314 = vmatpush1.bf16.msra.mxu0 0
    %315 = vmatprep.subr.bf16.mxu0 0
    %316 = vmatpush1.bf16.msra.mxu0 0
    %317 = vmatprep.subr.bf16.mxu0 0
    %318 = vmatpush1.bf16.msra.mxu0 0
    %319 = vmatprep.subr.bf16.mxu0 0
    %320 = vmatpush1.bf16.msra.mxu0 0
    %321 = vmatprep.subr.bf16.mxu0 0
    %322 = vmatpush1.bf16.msra.mxu0 0
    %323 = vmatprep.subr.bf16.mxu0 0
    %324 = vmatpush1.bf16.msra.mxu0 0
    %325 = vmatprep.subr.bf16.mxu0 0
    %326 = vmatpush1.bf16.msra.mxu0 0
    %327 = vmatprep.subr.bf16.mxu0 0
    %328 = vmatpush1.bf16.msra.mxu0 0
    %329 = vmatprep.subr.bf16.mxu0 0
    %330 = vmatpush1.bf16.msra.mxu0 0
    %331 = vmatprep.subr.bf16.mxu0 0
    %332 = vmatpush1.bf16.msra.mxu0 0
    %333 = vmatprep.subr.bf16.mxu0 0
    %334 = vmatpush1.bf16.msra.mxu0 0
    %335 = vmatprep.subr.bf16.mxu0 0
    %336 = vmatpush1.bf16.msra.mxu0 0
    %337 = vmatprep.subr.bf16.mxu0 0
    %338 = vmatpush1.bf16.msra.mxu0 0
    %339 = vmatprep.mubr.bf16.mxu0 0
    %340 = vmatmul.mubr.bf16.gmra.mrb[0].mxu0 %v301
    %v341 = vpop.f32.mrb[0].mxu0
    %v342 = vadd.f32 0.0, %v341
    %v343 = vpop.f32.mrb[0].mxu0
    %v344 = vpop.f32.mrb[0].mxu0
    %v345 = vpop.f32.mrb[0].mxu0
    %346 = vdwg.mxu0
    %347 = vrot.lane.b32.xlu0 %v167, 64
    %v348 = vpop.permute.xlu0 %347
    %v350 = vsel %vm176, %v234, 0
    %v353 = vsel %vm303, %v348, 0
    %355 = vmatprep.subr.bf16.mxu0 0
    %356 = vmatpush1.bf16.msra.mxu0 %v353
    %357 = vmatprep.subr.bf16.mxu0 0
    %358 = vmatpush1.bf16.msra.mxu0 0
    %359 = vmatprep.subr.bf16.mxu0 0
    %360 = vmatpush1.bf16.msra.mxu0 0
    %361 = vmatprep.subr.bf16.mxu0 0
    %362 = vmatpush1.bf16.msra.mxu0 0
    %363 = vmatprep.subr.bf16.mxu0 0
    %364 = vmatpush1.bf16.msra.mxu0 0
    %365 = vmatprep.subr.bf16.mxu0 0
    %366 = vmatpush1.bf16.msra.mxu0 0
    %367 = vmatprep.subr.bf16.mxu0 0
    %368 = vmatpush1.bf16.msra.mxu0 0
    %369 = vmatprep.subr.bf16.mxu0 0
    %370 = vmatpush1.bf16.msra.mxu0 0
    %371 = vmatprep.subr.bf16.mxu0 0
    %372 = vmatpush1.bf16.msra.mxu0 0
    %373 = vmatprep.subr.bf16.mxu0 0
    %374 = vmatpush1.bf16.msra.mxu0 0
    %375 = vmatprep.subr.bf16.mxu0 0
    %376 = vmatpush1.bf16.msra.mxu0 0
    %377 = vmatprep.subr.bf16.mxu0 0
    %378 = vmatpush1.bf16.msra.mxu0 0
    %379 = vmatprep.subr.bf16.mxu0 0
    %380 = vmatpush1.bf16.msra.mxu0 0
    %381 = vmatprep.subr.bf16.mxu0 0
    %382 = vmatpush1.bf16.msra.mxu0 0
    %383 = vmatprep.subr.bf16.mxu0 0
    %384 = vmatpush1.bf16.msra.mxu0 0
    %385 = vmatprep.subr.bf16.mxu0 0
    %386 = vmatpush1.bf16.msra.mxu0 0
    %387 = vmatprep.mubr.bf16.mxu0 0
    %388 = vmatmul.mubr.bf16.gmra.mrb[0].mxu0 %v350
    %v389 = vpop.f32.mrb[0].mxu0
    %v390 = vadd.f32 %v342, %v389
    %v391 = vpop.f32.mrb[0].mxu0
    %v392 = vpop.f32.mrb[0].mxu0
    %v393 = vpop.f32.mrb[0].mxu0
    %394 = vdwg.mxu0
    %395 = vrot.lane.b32.xlu0 %v166, 112
    %v396 = vpop.permute.xlu0 %395
    %397 = vrot.lane.b32.xlu0 %v166, 80
    %v398 = vpop.permute.xlu0 %397
    %v400 = vsel %vm176, %v396, 0
    %v403 = vsel %vm176, %v398, 0
    %405 = vmatprep.subr.bf16.mxu0 0
    %406 = vmatpush1.bf16.xpose.msra.mxu0 %v403
    %407 = vmatprep.subr.bf16.mxu0 0
    %408 = vmatpush1.bf16.xpose.msra.mxu0 0
    %409 = vmatprep.subr.bf16.mxu0 0
    %410 = vmatpush1.bf16.xpose.msra.mxu0 0
    %411 = vmatprep.subr.bf16.mxu0 0
    %412 = vmatpush1.bf16.xpose.msra.mxu0 0
    %413 = vmatprep.subr.bf16.mxu0 0
    %414 = vmatpush1.bf16.xpose.msra.mxu0 0
    %415 = vmatprep.subr.bf16.mxu0 0
    %416 = vmatpush1.bf16.xpose.msra.mxu0 0
    %417 = vmatprep.subr.bf16.mxu0 0
    %418 = vmatpush1.bf16.xpose.msra.mxu0 0
    %419 = vmatprep.subr.bf16.mxu0 0
    %420 = vmatpush1.bf16.xpose.msra.mxu0 0
    %421 = vmatprep.subr.bf16.mxu0 0
    %422 = vmatpush1.bf16.xpose.msra.mxu0 0
    %423 = vmatprep.subr.bf16.mxu0 0
    %424 = vmatpush1.bf16.xpose.msra.mxu0 0
    %425 = vmatprep.subr.bf16.mxu0 0
    %426 = vmatpush1.bf16.xpose.msra.mxu0 0
    %427 = vmatprep.subr.bf16.mxu0 0
    %428 = vmatpush1.bf16.xpose.msra.mxu0 0
    %429 = vmatprep.subr.bf16.mxu0 0
    %430 = vmatpush1.bf16.xpose.msra.mxu0 0
    %431 = vmatprep.subr.bf16.mxu0 0
    %432 = vmatpush1.bf16.xpose.msra.mxu0 0
    %433 = vmatprep.subr.bf16.mxu0 0
    %434 = vmatpush1.bf16.xpose.msra.mxu0 0
    %435 = vmatprep.subr.bf16.mxu0 0
    %436 = vmatpush1.bf16.xpose.msra.mxu0 0
    %437 = vmatprep.mubr.bf16.mxu0 0
    %438 = vmatmul.mubr.bf16.gmra.mrb[0].mxu0 %v400
    %v439 = vpop.f32.mrb[0].mxu0
    %v440 = vadd.f32 %v172, %v439
    %v441 = vpop.f32.mrb[0].mxu0
    %v442 = vpop.f32.mrb[0].mxu0
    %v443 = vpop.f32.mrb[0].mxu0
    %444 = vdwg.mxu0
    %v445 = vsel %vm176, %v440, -inf
    %446 = vmax.xlane.f32.xlu0 %v445
    %v447 = vpop.xlane.xlu0 %446
    %v448 = vsub.f32 %v440, %v447
    %v449 = vmul.f32 %v448, 1.442695
    %v450 = vpow.pop %v449
    %v451 = vsel %vm176, %v450, 0.0
    %452 = vadd.xlane.f32.xlu0 %v451
    %v453 = vpop.xlane.xlu0 %452
    %v454 = vrcp.pop %v453
    %v455 = vmul.f32 %v450, %v454
    %v456 = vpack.c.bf16 %v455, %v455
    %v458 = vsel %vm176, %v456, 0
    %v461 = vsel %vm303, %v168, 0
    %463 = vmatprep.subr.bf16.mxu0 0
    %464 = vmatpush1.bf16.msra.mxu0 %v461
    %465 = vmatprep.subr.bf16.mxu0 0
    %466 = vmatpush1.bf16.msra.mxu0 0
    %467 = vmatprep.subr.bf16.mxu0 0
    %468 = vmatpush1.bf16.msra.mxu0 0
    %469 = vmatprep.subr.bf16.mxu0 0
    %470 = vmatpush1.bf16.msra.mxu0 0
    %471 = vmatprep.subr.bf16.mxu0 0
    %472 = vmatpush1.bf16.msra.mxu0 0
    %473 = vmatprep.subr.bf16.mxu0 0
    %474 = vmatpush1.bf16.msra.mxu0 0
    %475 = vmatprep.subr.bf16.mxu0 0
    %476 = vmatpush1.bf16.msra.mxu0 0
    %477 = vmatprep.subr.bf16.mxu0 0
    %478 = vmatpush1.bf16.msra.mxu0 0
    %479 = vmatprep.subr.bf16.mxu0 0
    %480 = vmatpush1.bf16.msra.mxu0 0
    %481 = vmatprep.subr.bf16.mxu0 0
    %482 = vmatpush1.bf16.msra.mxu0 0
    %483 = vmatprep.subr.bf16.mxu0 0
    %484 = vmatpush1.bf16.msra.mxu0 0
    %485 = vmatprep.subr.bf16.mxu0 0
    %486 = vmatpush1.bf16.msra.mxu0 0
    %487 = vmatprep.subr.bf16.mxu0 0
    %488 = vmatpush1.bf16.msra.mxu0 0
    %489 = vmatprep.subr.bf16.mxu0 0
    %490 = vmatpush1.bf16.msra.mxu0 0
    %491 = vmatprep.subr.bf16.mxu0 0
    %492 = vmatpush1.bf16.msra.mxu0 0
    %493 = vmatprep.subr.bf16.mxu0 0
    %494 = vmatpush1.bf16.msra.mxu0 0
    %495 = vmatprep.mubr.bf16.mxu0 0
    %496 = vmatmul.mubr.bf16.gmra.mrb[0].mxu0 %v458
    %v497 = vpop.f32.mrb[0].mxu0
    %v498 = vadd.f32 0.0, %v497
    %v499 = vpop.f32.mrb[0].mxu0
    %v500 = vpop.f32.mrb[0].mxu0
    %v501 = vpop.f32.mrb[0].mxu0
    %502 = vdwg.mxu0
    %v503 = vadd.f32 %v390, %v498
    %504 = vrot.lane.b32.xlu0 %v166, 104
    %v505 = vpop.permute.xlu0 %504
    %506 = vrot.lane.b32.xlu0 %v166, 72
    %v507 = vpop.permute.xlu0 %506
    %v509 = vsel %vm176, %v505, 0
    %v512 = vsel %vm176, %v507, 0
    %514 = vmatprep.subr.bf16.mxu0 0
    %515 = vmatpush1.bf16.xpose.msra.mxu0 %v512
    %516 = vmatprep.subr.bf16.mxu0 0
    %517 = vmatpush1.bf16.xpose.msra.mxu0 0
    %518 = vmatprep.subr.bf16.mxu0 0
    %519 = vmatpush1.bf16.xpose.msra.mxu0 0
    %520 = vmatprep.subr.bf16.mxu0 0
    %521 = vmatpush1.bf16.xpose.msra.mxu0 0
    %522 = vmatprep.subr.bf16.mxu0 0
    %523 = vmatpush1.bf16.xpose.msra.mxu0 0
    %524 = vmatprep.subr.bf16.mxu0 0
    %525 = vmatpush1.bf16.xpose.msra.mxu0 0
    %526 = vmatprep.subr.bf16.mxu0 0
    %527 = vmatpush1.bf16.xpose.msra.mxu0 0
    %528 = vmatprep.subr.bf16.mxu0 0
    %529 = vmatpush1.bf16.xpose.msra.mxu0 0
    %530 = vmatprep.subr.bf16.mxu0 0
    %531 = vmatpush1.bf16.xpose.msra.mxu0 0
    %532 = vmatprep.subr.bf16.mxu0 0
    %533 = vmatpush1.bf16.xpose.msra.mxu0 0
    %534 = vmatprep.subr.bf16.mxu0 0
    %535 = vmatpush1.bf16.xpose.msra.mxu0 0
    %536 = vmatprep.subr.bf16.mxu0 0
    %537 = vmatpush1.bf16.xpose.msra.mxu0 0
    %538 = vmatprep.subr.bf16.mxu0 0
    %539 = vmatpush1.bf16.xpose.msra.mxu0 0
    %540 = vmatprep.subr.bf16.mxu0 0
    %541 = vmatpush1.bf16.xpose.msra.mxu0 0
    %542 = vmatprep.subr.bf16.mxu0 0
    %543 = vmatpush1.bf16.xpose.msra.mxu0 0
    %544 = vmatprep.subr.bf16.mxu0 0
    %545 = vmatpush1.bf16.xpose.msra.mxu0 0
    %546 = vmatprep.mubr.bf16.mxu0 0
    %547 = vmatmul.mubr.bf16.gmra.mrb[0].mxu0 %v509
    %v548 = vpop.f32.mrb[0].mxu0
    %v549 = vadd.f32 %v172, %v548
    %v550 = vpop.f32.mrb[0].mxu0
    %v551 = vpop.f32.mrb[0].mxu0
    %v552 = vpop.f32.mrb[0].mxu0
    %553 = vdwg.mxu0
    %v554 = vsel %vm176, %v549, -inf
    %555 = vmax.xlane.f32.xlu0 %v554
    %v556 = vpop.xlane.xlu0 %555
    %v557 = vsub.f32 %v549, %v556
    %v558 = vmul.f32 %v557, 1.442695
    %v559 = vpow.pop %v558
    %v560 = vsel %vm176, %v559, 0.0
    %561 = vadd.xlane.f32.xlu0 %v560
    %v562 = vpop.xlane.xlu0 %561
    %v563 = vrcp.pop %v562
    %v564 = vmul.f32 %v559, %v563
    %v565 = vpack.c.bf16 %v564, %v564
    %567 = vrot.lane.b32.xlu0 %v168, 96
    %v568 = vpop.permute.xlu0 %567
    %v570 = vsel %vm176, %v565, 0
    %v573 = vsel %vm303, %v568, 0
    %575 = vmatprep.subr.bf16.mxu0 0
    %576 = vmatpush1.bf16.msra.mxu0 %v573
    %577 = vmatprep.subr.bf16.mxu0 0
    %578 = vmatpush1.bf16.msra.mxu0 0
    %579 = vmatprep.subr.bf16.mxu0 0
    %580 = vmatpush1.bf16.msra.mxu0 0
    %581 = vmatprep.subr.bf16.mxu0 0
    %582 = vmatpush1.bf16.msra.mxu0 0
    %583 = vmatprep.subr.bf16.mxu0 0
    %584 = vmatpush1.bf16.msra.mxu0 0
    %585 = vmatprep.subr.bf16.mxu0 0
    %586 = vmatpush1.bf16.msra.mxu0 0
    %587 = vmatprep.subr.bf16.mxu0 0
    %588 = vmatpush1.bf16.msra.mxu0 0
    %589 = vmatprep.subr.bf16.mxu0 0
    %590 = vmatpush1.bf16.msra.mxu0 0
    %591 = vmatprep.subr.bf16.mxu0 0
    %592 = vmatpush1.bf16.msra.mxu0 0
    %593 = vmatprep.subr.bf16.mxu0 0
    %594 = vmatpush1.bf16.msra.mxu0 0
    %595 = vmatprep.subr.bf16.mxu0 0
    %596 = vmatpush1.bf16.msra.mxu0 0
    %597 = vmatprep.subr.bf16.mxu0 0
    %598 = vmatpush1.bf16.msra.mxu0 0
    %599 = vmatprep.subr.bf16.mxu0 0
    %600 = vmatpush1.bf16.msra.mxu0 0
    %601 = vmatprep.subr.bf16.mxu0 0
    %602 = vmatpush1.bf16.msra.mxu0 0
    %603 = vmatprep.subr.bf16.mxu0 0
    %604 = vmatpush1.bf16.msra.mxu0 0
    %605 = vmatprep.subr.bf16.mxu0 0
    %606 = vmatpush1.bf16.msra.mxu0 0
    %607 = vmatprep.mubr.bf16.mxu0 0
    %608 = vmatmul.mubr.bf16.gmra.mrb[0].mxu0 %v570
    %v609 = vpop.f32.mrb[0].mxu0
    %v610 = vadd.f32 0.0, %v609
    %v611 = vpop.f32.mrb[0].mxu0
    %v612 = vpop.f32.mrb[0].mxu0
    %v613 = vpop.f32.mrb[0].mxu0
    %614 = vdwg.mxu0
    %v615 = vadd.f32 %v503, %v610
    %v616 = vlaneseq
    %v617 = vshrl.u32 %v616, 7
    %v618 = vsub.s32 1, %v617
    %v619 = vrot.slane %v40, %v618
    %v620 = vrot.slane %v166, 4
    %621 = vrot.lane.b32.xlu0 %v620, 96
    %v622 = vpop.permute.xlu0 %621
    %v624 = vsel %vm176, %v620, 0
    %v627 = vsel %vm176, %v622, 0
    %629 = vmatprep.subr.bf16.mxu0 0
    %630 = vmatpush1.bf16.xpose.msra.mxu0 %v627
    %631 = vmatprep.subr.bf16.mxu0 0
    %632 = vmatpush1.bf16.xpose.msra.mxu0 0
    %633 = vmatprep.subr.bf16.mxu0 0
    %634 = vmatpush1.bf16.xpose.msra.mxu0 0
    %635 = vmatprep.subr.bf16.mxu0 0
    %636 = vmatpush1.bf16.xpose.msra.mxu0 0
    %637 = vmatprep.subr.bf16.mxu0 0
    %638 = vmatpush1.bf16.xpose.msra.mxu0 0
    %639 = vmatprep.subr.bf16.mxu0 0
    %640 = vmatpush1.bf16.xpose.msra.mxu0 0
    %641 = vmatprep.subr.bf16.mxu0 0
    %642 = vmatpush1.bf16.xpose.msra.mxu0 0
    %643 = vmatprep.subr.bf16.mxu0 0
    %644 = vmatpush1.bf16.xpose.msra.mxu0 0
    %645 = vmatprep.subr.bf16.mxu0 0
    %646 = vmatpush1.bf16.xpose.msra.mxu0 0
    %647 = vmatprep.subr.bf16.mxu0 0
    %648 = vmatpush1.bf16.xpose.msra.mxu0 0
    %649 = vmatprep.subr.bf16.mxu0 0
    %650 = vmatpush1.bf16.xpose.msra.mxu0 0
    %651 = vmatprep.subr.bf16.mxu0 0
    %652 = vmatpush1.bf16.xpose.msra.mxu0 0
    %653 = vmatprep.subr.bf16.mxu0 0
    %654 = vmatpush1.bf16.xpose.msra.mxu0 0
    %655 = vmatprep.subr.bf16.mxu0 0
    %656 = vmatpush1.bf16.xpose.msra.mxu0 0
    %657 = vmatprep.subr.bf16.mxu0 0
    %658 = vmatpush1.bf16.xpose.msra.mxu0 0
    %659 = vmatprep.subr.bf16.mxu0 0
    %660 = vmatpush1.bf16.xpose.msra.mxu0 0
    %661 = vmatprep.mubr.bf16.mxu0 0
    %662 = vmatmul.mubr.bf16.gmra.mrb[0].mxu0 %v624
    %v663 = vpop.f32.mrb[0].mxu0
    %v664 = vadd.f32 %v619, %v663
    %v665 = vpop.f32.mrb[0].mxu0
    %v666 = vpop.f32.mrb[0].mxu0
    %v667 = vpop.f32.mrb[0].mxu0
    %668 = vdwg.mxu0
    %v669 = vsel %vm176, %v664, -inf
    %670 = vmax.xlane.f32.xlu0 %v669
    %v671 = vpop.xlane.xlu0 %670
    %v672 = vsub.f32 %v664, %v671
    %v673 = vmul.f32 %v672, 1.442695
    %v674 = vpow.pop %v673
    %v675 = vsel %vm176, %v674, 0.0
    %676 = vadd.xlane.f32.xlu0 %v675
    %v677 = vpop.xlane.xlu0 %676
    %v678 = vrcp.pop %v677
    %v679 = vmul.f32 %v674, %v678
    %v680 = vpack.c.bf16 %v679, %v679
    %681 = vrot.lane.b32.xlu0 %v620, 120
    %v682 = vpop.permute.xlu0 %681
    %683 = vrot.lane.b32.xlu0 %v620, 88
    %v684 = vpop.permute.xlu0 %683
    %v686 = vsel %vm176, %v682, 0
    %v689 = vsel %vm176, %v684, 0
    %691 = vmatprep.subr.bf16.mxu0 0
    %692 = vmatpush1.bf16.xpose.msra.mxu0 %v689
    %693 = vmatprep.subr.bf16.mxu0 0
    %694 = vmatpush1.bf16.xpose.msra.mxu0 0
    %695 = vmatprep.subr.bf16.mxu0 0
    %696 = vmatpush1.bf16.xpose.msra.mxu0 0
    %697 = vmatprep.subr.bf16.mxu0 0
    %698 = vmatpush1.bf16.xpose.msra.mxu0 0
    %699 = vmatprep.subr.bf16.mxu0 0
    %700 = vmatpush1.bf16.xpose.msra.mxu0 0
    %701 = vmatprep.subr.bf16.mxu0 0
    %702 = vmatpush1.bf16.xpose.msra.mxu0 0
    %703 = vmatprep.subr.bf16.mxu0 0
    %704 = vmatpush1.bf16.xpose.msra.mxu0 0
    %705 = vmatprep.subr.bf16.mxu0 0
    %706 = vmatpush1.bf16.xpose.msra.mxu0 0
    %707 = vmatprep.subr.bf16.mxu0 0
    %708 = vmatpush1.bf16.xpose.msra.mxu0 0
    %709 = vmatprep.subr.bf16.mxu0 0
    %710 = vmatpush1.bf16.xpose.msra.mxu0 0
    %711 = vmatprep.subr.bf16.mxu0 0
    %712 = vmatpush1.bf16.xpose.msra.mxu0 0
    %713 = vmatprep.subr.bf16.mxu0 0
    %714 = vmatpush1.bf16.xpose.msra.mxu0 0
    %715 = vmatprep.subr.bf16.mxu0 0
    %716 = vmatpush1.bf16.xpose.msra.mxu0 0
    %717 = vmatprep.subr.bf16.mxu0 0
    %718 = vmatpush1.bf16.xpose.msra.mxu0 0
    %719 = vmatprep.subr.bf16.mxu0 0
    %720 = vmatpush1.bf16.xpose.msra.mxu0 0
    %721 = vmatprep.subr.bf16.mxu0 0
    %722 = vmatpush1.bf16.xpose.msra.mxu0 0
    %723 = vmatprep.mubr.bf16.mxu0 0
    %724 = vmatmul.mubr.bf16.gmra.mrb[0].mxu0 %v686
    %v725 = vpop.f32.mrb[0].mxu0
    %v726 = vadd.f32 %v619, %v725
    %v727 = vpop.f32.mrb[0].mxu0
    %v728 = vpop.f32.mrb[0].mxu0
    %v729 = vpop.f32.mrb[0].mxu0
    %730 = vdwg.mxu0
    %v731 = vsel %vm176, %v726, -inf
    %732 = vmax.xlane.f32.xlu0 %v731
    %v733 = vpop.xlane.xlu0 %732
    %v734 = vsub.f32 %v726, %v733
    %v735 = vmul.f32 %v734, 1.442695
    %v736 = vpow.pop %v735
    %v737 = vsel %vm176, %v736, 0.0
    %738 = vadd.xlane.f32.xlu0 %v737
    %v739 = vpop.xlane.xlu0 %738
    %v740 = vrcp.pop %v739
    %v741 = vmul.f32 %v736, %v740
    %v742 = vpack.c.bf16 %v741, %v741
    %v743 = vrot.slane %v167, 4
    %744 = vrot.lane.b32.xlu0 %v743, 32
    %v745 = vpop.permute.xlu0 %744
    %v747 = vsel %vm176, %v742, 0
    %v750 = vsel %vm303, %v745, 0
    %752 = vmatprep.subr.bf16.mxu0 0
    %753 = vmatpush1.bf16.msra.mxu0 %v750
    %754 = vmatprep.subr.bf16.mxu0 0
    %755 = vmatpush1.bf16.msra.mxu0 0
    %756 = vmatprep.subr.bf16.mxu0 0
    %757 = vmatpush1.bf16.msra.mxu0 0
    %758 = vmatprep.subr.bf16.mxu0 0
    %759 = vmatpush1.bf16.msra.mxu0 0
    %760 = vmatprep.subr.bf16.mxu0 0
    %761 = vmatpush1.bf16.msra.mxu0 0
    %762 = vmatprep.subr.bf16.mxu0 0
    %763 = vmatpush1.bf16.msra.mxu0 0
    %764 = vmatprep.subr.bf16.mxu0 0
    %765 = vmatpush1.bf16.msra.mxu0 0
    %766 = vmatprep.subr.bf16.mxu0 0
    %767 = vmatpush1.bf16.msra.mxu0 0
    %768 = vmatprep.subr.bf16.mxu0 0
    %769 = vmatpush1.bf16.msra.mxu0 0
    %770 = vmatprep.subr.bf16.mxu0 0
    %771 = vmatpush1.bf16.msra.mxu0 0
    %772 = vmatprep.subr.bf16.mxu0 0
    %773 = vmatpush1.bf16.msra.mxu0 0
    %774 = vmatprep.subr.bf16.mxu0 0
    %775 = vmatpush1.bf16.msra.mxu0 0
    %776 = vmatprep.subr.bf16.mxu0 0
    %777 = vmatpush1.bf16.msra.mxu0 0
    %778 = vmatprep.subr.bf16.mxu0 0
    %779 = vmatpush1.bf16.msra.mxu0 0
    %780 = vmatprep.subr.bf16.mxu0 0
    %781 = vmatpush1.bf16.msra.mxu0 0
    %782 = vmatprep.subr.bf16.mxu0 0
    %783 = vmatpush1.bf16.msra.mxu0 0
    %784 = vmatprep.mubr.bf16.mxu0 0
    %785 = vmatmul.mubr.bf16.gmra.mrb[0].mxu0 %v747
    %v786 = vpop.f32.mrb[0].mxu0
    %v787 = vadd.f32 0.0, %v786
    %v788 = vpop.f32.mrb[0].mxu0
    %v789 = vpop.f32.mrb[0].mxu0
    %v790 = vpop.f32.mrb[0].mxu0
    %791 = vdwg.mxu0
    %792 = vrot.lane.b32.xlu0 %v743, 64
    %v793 = vpop.permute.xlu0 %792
    %v795 = vsel %vm176, %v680, 0
    %v798 = vsel %vm303, %v793, 0
    %800 = vmatprep.subr.bf16.mxu0 0
    %801 = vmatpush1.bf16.msra.mxu0 %v798
    %802 = vmatprep.subr.bf16.mxu0 0
    %803 = vmatpush1.bf16.msra.mxu0 0
    %804 = vmatprep.subr.bf16.mxu0 0
    %805 = vmatpush1.bf16.msra.mxu0 0
    %806 = vmatprep.subr.bf16.mxu0 0
    %807 = vmatpush1.bf16.msra.mxu0 0
    %808 = vmatprep.subr.bf16.mxu0 0
    %809 = vmatpush1.bf16.msra.mxu0 0
    %810 = vmatprep.subr.bf16.mxu0 0
    %811 = vmatpush1.bf16.msra.mxu0 0
    %812 = vmatprep.subr.bf16.mxu0 0
    %813 = vmatpush1.bf16.msra.mxu0 0
    %814 = vmatprep.subr.bf16.mxu0 0
    %815 = vmatpush1.bf16.msra.mxu0 0
    %816 = vmatprep.subr.bf16.mxu0 0
    %817 = vmatpush1.bf16.msra.mxu0 0
    %818 = vmatprep.subr.bf16.mxu0 0
    %819 = vmatpush1.bf16.msra.mxu0 0
    %820 = vmatprep.subr.bf16.mxu0 0
    %821 = vmatpush1.bf16.msra.mxu0 0
    %822 = vmatprep.subr.bf16.mxu0 0
    %823 = vmatpush1.bf16.msra.mxu0 0
    %824 = vmatprep.subr.bf16.mxu0 0
    %825 = vmatpush1.bf16.msra.mxu0 0
    %826 = vmatprep.subr.bf16.mxu0 0
    %827 = vmatpush1.bf16.msra.mxu0 0
    %828 = vmatprep.subr.bf16.mxu0 0
    %829 = vmatpush1.bf16.msra.mxu0 0
    %830 = vmatprep.subr.bf16.mxu0 0
    %831 = vmatpush1.bf16.msra.mxu0 0
    %832 = vmatprep.mubr.bf16.mxu0 0
    %833 = vmatmul.mubr.bf16.gmra.mrb[0].mxu0 %v795
    %v834 = vpop.f32.mrb[0].mxu0
    %v835 = vadd.f32 %v787, %v834
    %v836 = vpop.f32.mrb[0].mxu0
    %v837 = vpop.f32.mrb[0].mxu0
    %v838 = vpop.f32.mrb[0].mxu0
    %839 = vdwg.mxu0
    %840 = vrot.lane.b32.xlu0 %v620, 112
    %v841 = vpop.permute.xlu0 %840
    %842 = vrot.lane.b32.xlu0 %v620, 80
    %v843 = vpop.permute.xlu0 %842
    %v845 = vsel %vm176, %v841, 0
    %v848 = vsel %vm176, %v843, 0
    %850 = vmatprep.subr.bf16.mxu0 0
    %851 = vmatpush1.bf16.xpose.msra.mxu0 %v848
    %852 = vmatprep.subr.bf16.mxu0 0
    %853 = vmatpush1.bf16.xpose.msra.mxu0 0
    %854 = vmatprep.subr.bf16.mxu0 0
    %855 = vmatpush1.bf16.xpose.msra.mxu0 0
    %856 = vmatprep.subr.bf16.mxu0 0
    %857 = vmatpush1.bf16.xpose.msra.mxu0 0
    %858 = vmatprep.subr.bf16.mxu0 0
    %859 = vmatpush1.bf16.xpose.msra.mxu0 0
    %860 = vmatprep.subr.bf16.mxu0 0
    %861 = vmatpush1.bf16.xpose.msra.mxu0 0
    %862 = vmatprep.subr.bf16.mxu0 0
    %863 = vmatpush1.bf16.xpose.msra.mxu0 0
    %864 = vmatprep.subr.bf16.mxu0 0
    %865 = vmatpush1.bf16.xpose.msra.mxu0 0
    %866 = vmatprep.subr.bf16.mxu0 0
    %867 = vmatpush1.bf16.xpose.msra.mxu0 0
    %868 = vmatprep.subr.bf16.mxu0 0
    %869 = vmatpush1.bf16.xpose.msra.mxu0 0
    %870 = vmatprep.subr.bf16.mxu0 0
    %871 = vmatpush1.bf16.xpose.msra.mxu0 0
    %872 = vmatprep.subr.bf16.mxu0 0
    %873 = vmatpush1.bf16.xpose.msra.mxu0 0
    %874 = vmatprep.subr.bf16.mxu0 0
    %875 = vmatpush1.bf16.xpose.msra.mxu0 0
    %876 = vmatprep.subr.bf16.mxu0 0
    %877 = vmatpush1.bf16.xpose.msra.mxu0 0
    %878 = vmatprep.subr.bf16.mxu0 0
    %879 = vmatpush1.bf16.xpose.msra.mxu0 0
    %880 = vmatprep.subr.bf16.mxu0 0
    %881 = vmatpush1.bf16.xpose.msra.mxu0 0
    %882 = vmatprep.mubr.bf16.mxu0 0
    %883 = vmatmul.mubr.bf16.gmra.mrb[0].mxu0 %v845
    %v884 = vpop.f32.mrb[0].mxu0
    %v885 = vadd.f32 %v619, %v884
    %v886 = vpop.f32.mrb[0].mxu0
    %v887 = vpop.f32.mrb[0].mxu0
    %v888 = vpop.f32.mrb[0].mxu0
    %889 = vdwg.mxu0
    %v890 = vsel %vm176, %v885, -inf
    %891 = vmax.xlane.f32.xlu0 %v890
    %v892 = vpop.xlane.xlu0 %891
    %v893 = vsub.f32 %v885, %v892
    %v894 = vmul.f32 %v893, 1.442695
    %v895 = vpow.pop %v894
    %v896 = vsel %vm176, %v895, 0.0
    %897 = vadd.xlane.f32.xlu0 %v896
    %v898 = vpop.xlane.xlu0 %897
    %v899 = vrcp.pop %v898
    %v900 = vmul.f32 %v895, %v899
    %v901 = vpack.c.bf16 %v900, %v900
    %v902 = vrot.slane %v168, 4
    %v904 = vsel %vm176, %v901, 0
    %v907 = vsel %vm303, %v902, 0
    %909 = vmatprep.subr.bf16.mxu0 0
    %910 = vmatpush1.bf16.msra.mxu0 %v907
    %911 = vmatprep.subr.bf16.mxu0 0
    %912 = vmatpush1.bf16.msra.mxu0 0
    %913 = vmatprep.subr.bf16.mxu0 0
    %914 = vmatpush1.bf16.msra.mxu0 0
    %915 = vmatprep.subr.bf16.mxu0 0
    %916 = vmatpush1.bf16.msra.mxu0 0
    %917 = vmatprep.subr.bf16.mxu0 0
    %918 = vmatpush1.bf16.msra.mxu0 0
    %919 = vmatprep.subr.bf16.mxu0 0
    %920 = vmatpush1.bf16.msra.mxu0 0
    %921 = vmatprep.subr.bf16.mxu0 0
    %922 = vmatpush1.bf16.msra.mxu0 0
    %923 = vmatprep.subr.bf16.mxu0 0
    %924 = vmatpush1.bf16.msra.mxu0 0
    %925 = vmatprep.subr.bf16.mxu0 0
    %926 = vmatpush1.bf16.msra.mxu0 0
    %927 = vmatprep.subr.bf16.mxu0 0
    %928 = vmatpush1.bf16.msra.mxu0 0
    %929 = vmatprep.subr.bf16.mxu0 0
    %930 = vmatpush1.bf16.msra.mxu0 0
    %931 = vmatprep.subr.bf16.mxu0 0
    %932 = vmatpush1.bf16.msra.mxu0 0
    %933 = vmatprep.subr.bf16.mxu0 0
    %934 = vmatpush1.bf16.msra.mxu0 0
    %935 = vmatprep.subr.bf16.mxu0 0
    %936 = vmatpush1.bf16.msra.mxu0 0
    %937 = vmatprep.subr.bf16.mxu0 0
    %938 = vmatpush1.bf16.msra.mxu0 0
    %939 = vmatprep.subr.bf16.mxu0 0
    %940 = vmatpush1.bf16.msra.mxu0 0
    %941 = vmatprep.mubr.bf16.mxu0 0
    %942 = vmatmul.mubr.bf16.gmra.mrb[0].mxu0 %v904
    %v943 = vpop.f32.mrb[0].mxu0
    %v944 = vadd.f32 0.0, %v943
    %v945 = vpop.f32.mrb[0].mxu0
    %v946 = vpop.f32.mrb[0].mxu0
    %v947 = vpop.f32.mrb[0].mxu0
    %948 = vdwg.mxu0
    %v949 = vadd.f32 %v835, %v944
    %950 = vrot.lane.b32.xlu0 %v620, 104
    %v951 = vpop.permute.xlu0 %950
    %952 = vrot.lane.b32.xlu0 %v620, 72
    %v953 = vpop.permute.xlu0 %952
    %v955 = vsel %vm176, %v951, 0
    %v958 = vsel %vm176, %v953, 0
    %960 = vmatprep.subr.bf16.mxu0 0
    %961 = vmatpush1.bf16.xpose.msra.mxu0 %v958
    %962 = vmatprep.subr.bf16.mxu0 0
    %963 = vmatpush1.bf16.xpose.msra.mxu0 0
    %964 = vmatprep.subr.bf16.mxu0 0
    %965 = vmatpush1.bf16.xpose.msra.mxu0 0
    %966 = vmatprep.subr.bf16.mxu0 0
    %967 = vmatpush1.bf16.xpose.msra.mxu0 0
    %968 = vmatprep.subr.bf16.mxu0 0
    %969 = vmatpush1.bf16.xpose.msra.mxu0 0
    %970 = vmatprep.subr.bf16.mxu0 0
    %971 = vmatpush1.bf16.xpose.msra.mxu0 0
    %972 = vmatprep.subr.bf16.mxu0 0
    %973 = vmatpush1.bf16.xpose.msra.mxu0 0
    %974 = vmatprep.subr.bf16.mxu0 0
    %975 = vmatpush1.bf16.xpose.msra.mxu0 0
    %976 = vmatprep.subr.bf16.mxu0 0
    %977 = vmatpush1.bf16.xpose.msra.mxu0 0
    %978 = vmatprep.subr.bf16.mxu0 0
    %979 = vmatpush1.bf16.xpose.msra.mxu0 0
    %980 = vmatprep.subr.bf16.mxu0 0
    %981 = vmatpush1.bf16.xpose.msra.mxu0 0
    %982 = vmatprep.subr.bf16.mxu0 0
    %983 = vmatpush1.bf16.xpose.msra.mxu0 0
    %984 = vmatprep.subr.bf16.mxu0 0
    %985 = vmatpush1.bf16.xpose.msra.mxu0 0
    %986 = vmatprep.subr.bf16.mxu0 0
    %987 = vmatpush1.bf16.xpose.msra.mxu0 0
    %988 = vmatprep.subr.bf16.mxu0 0
    %989 = vmatpush1.bf16.xpose.msra.mxu0 0
    %990 = vmatprep.subr.bf16.mxu0 0
    %991 = vmatpush1.bf16.xpose.msra.mxu0 0
    %992 = vmatprep.mubr.bf16.mxu0 0
    %993 = vmatmul.mubr.bf16.gmra.mrb[0].mxu0 %v955
    %v994 = vpop.f32.mrb[0].mxu0
    %v995 = vadd.f32 %v619, %v994
    %v996 = vpop.f32.mrb[0].mxu0
    %v997 = vpop.f32.mrb[0].mxu0
    %v998 = vpop.f32.mrb[0].mxu0
    %999 = vdwg.mxu0
    %v1000 = vsel %vm176, %v995, -inf
    %1001 = vmax.xlane.f32.xlu0 %v1000
    %v1002 = vpop.xlane.xlu0 %1001
    %v1003 = vsub.f32 %v995, %v1002
    %v1004 = vmul.f32 %v1003, 1.442695
    %v1005 = vpow.pop %v1004
    %v1006 = vsel %vm176, %v1005, 0.0
    %1007 = vadd.xlane.f32.xlu0 %v1006
    %v1008 = vpop.xlane.xlu0 %1007
    %v1009 = vrcp.pop %v1008
    %v1010 = vmul.f32 %v1005, %v1009
    %v1011 = vpack.c.bf16 %v1010, %v1010
    %1012 = vrot.lane.b32.xlu0 %v902, 96
    %v1013 = vpop.permute.xlu0 %1012
    %v1015 = vsel %vm176, %v1011, 0
    %v1018 = vsel %vm303, %v1013, 0
    %1020 = vmatprep.subr.bf16.mxu0 0
    %1021 = vmatpush1.bf16.msra.mxu0 %v1018
    %1022 = vmatprep.subr.bf16.mxu0 0
    %1023 = vmatpush1.bf16.msra.mxu0 0
    %1024 = vmatprep.subr.bf16.mxu0 0
    %1025 = vmatpush1.bf16.msra.mxu0 0
    %1026 = vmatprep.subr.bf16.mxu0 0
    %1027 = vmatpush1.bf16.msra.mxu0 0
    %1028 = vmatprep.subr.bf16.mxu0 0
    %1029 = vmatpush1.bf16.msra.mxu0 0
    %1030 = vmatprep.subr.bf16.mxu0 0
    %1031 = vmatpush1.bf16.msra.mxu0 0
    %1032 = vmatprep.subr.bf16.mxu0 0
    %1033 = vmatpush1.bf16.msra.mxu0 0
    %1034 = vmatprep.subr.bf16.mxu0 0
    %1035 = vmatpush1.bf16.msra.mxu0 0
    %1036 = vmatprep.subr.bf16.mxu0 0
    %1037 = vmatpush1.bf16.msra.mxu0 0
    %1038 = vmatprep.subr.bf16.mxu0 0
    %1039 = vmatpush1.bf16.msra.mxu0 0
    %1040 = vmatprep.subr.bf16.mxu0 0
    %1041 = vmatpush1.bf16.msra.mxu0 0
    %1042 = vmatprep.subr.bf16.mxu0 0
    %1043 = vmatpush1.bf16.msra.mxu0 0
    %1044 = vmatprep.subr.bf16.mxu0 0
    %1045 = vmatpush1.bf16.msra.mxu0 0
    %1046 = vmatprep.subr.bf16.mxu0 0
    %1047 = vmatpush1.bf16.msra.mxu0 0
    %1048 = vmatprep.subr.bf16.mxu0 0
    %1049 = vmatpush1.bf16.msra.mxu0 0
    %1050 = vmatprep.subr.bf16.mxu0 0
    %1051 = vmatpush1.bf16.msra.mxu0 0
    %1052 = vmatprep.mubr.bf16.mxu0 0
    %1053 = vmatmul.mubr.bf16.gmra.mrb[0].mxu0 %v1015
    %v1054 = vpop.f32.mrb[0].mxu0
    %v1055 = vadd.f32 0.0, %v1054
    %v1056 = vpop.f32.mrb[0].mxu0
    %v1057 = vpop.f32.mrb[0].mxu0
    %v1058 = vpop.f32.mrb[0].mxu0
    %1059 = vdwg.mxu0
    %v1060 = vadd.f32 %v949, %v1055
    %v1061 = vlaneseq
    %v1062 = vshrl.u32 %v1061, 7
    %v1063 = vsub.s32 7, %v1062
    %v1064 = vrot.slane %v22, %v1063
    %v1065 = vadd.f32 %v615, %v1064
    %v1066 = vadd.f32 %v1060, %v1064
    %v1067 = vadd.f32 %v19, %v1065
    %v1068 = vadd.f32 %v20, %v1066
    %v1069 = vsel %vm41, %v1067, 0.0
    %1070 = vadd.xlane.f32.xlu0 %v1069
    %v1071 = vpop.xlane.xlu0 %1070
    %v1072 = vsel %vm41, %v1068, 0.0
    %1073 = vadd.xlane.f32.xlu0 %v1072
    %v1074 = vpop.xlane.xlu0 %1073
    %v1075 = vmul.f32 %v1071, %v48
    %v1076 = vmul.f32 %v1074, %v48
    %v1077 = vsub.f32 %v1067, %v1075
    %v1078 = vsub.f32 %v1068, %v1076
    %v1079 = vmul.f32 %v1077, %v1077
    %v1080 = vmul.f32 %v1078, %v1078
    %v1081 = vsel %vm41, %v1079, 0.0
    %1082 = vadd.xlane.f32.xlu0 %v1081
    %v1083 = vpop.xlane.xlu0 %1082
    %v1084 = vsel %vm41, %v1080, 0.0
    %1085 = vadd.xlane.f32.xlu0 %v1084
    %v1086 = vpop.xlane.xlu0 %1085
    %v1087 = vmul.f32 %v1083, %v48
    %v1088 = vmul.f32 %v1086, %v48
    %v1089 = vadd.f32 %v1087, 1e-05
    %v1090 = vadd.f32 %v1088, 1e-05
    %v1091 = vrsqrt.pop %v1089
    %v1092 = vrsqrt.pop %v1090
    %v1093 = vmul.f32 %v1077, %v1091
    %v1094 = vmul.f32 %v1078, %v1092
    %v1095 = vlaneseq
    %v1096 = vshrl.u32 %v1095, 7
    %v1097 = vsub.s32 2, %v1096
    %v1098 = vrot.slane %v22, %v1097
    %v1099 = vmul.f32 %v1093, %v1098
    %v1100 = vmul.f32 %v1094, %v1098
    %v1101 = vlaneseq
    %v1102 = vshrl.u32 %v1101, 7
    %v1103 = vsub.s32 3, %v1102
    %v1104 = vrot.slane %v22, %v1103
    %v1105 = vadd.f32 %v1099, %v1104
    %v1106 = vadd.f32 %v1100, %v1104
    %v1107 = vpack.c.bf16 %v1106, %v1105
    %v1108 = vlaneseq
    %v1109 = vshrl.u32 %v1108, 7
    %v1110 = vsub.s32 5, %v1109
    %v1111 = vrot.slane %v22, %v1110
    %v1116 = vunpack.c.l.b16 %v27
    %v1117 = vunpack.c.l.b16 %v28
    %v1118 = vunpack.c.l.b16 %v29
    %v1119 = vunpack.c.l.b16 %v30
    %v1120 = vpack.c.b16 %v1117, %v1116
    %v1121 = vpack.c.b16 %v1119, %v1118
    %v1125 = vsel %vm41, %v1107, 0
    %1127 = vmatprep.subr.bf16.mxu0 0
    %1128 = vmatpush1.bf16.msra.mxu0 %v1120
    %1129 = vmatprep.subr.bf16.mxu0 0
    %1130 = vmatpush1.bf16.msra.mxu0 %v1121
    %1131 = vmatprep.subr.bf16.mxu0 0
    %1132 = vmatpush1.bf16.msra.mxu0 0
    %1133 = vmatprep.subr.bf16.mxu0 0
    %1134 = vmatpush1.bf16.msra.mxu0 0
    %1135 = vmatprep.subr.bf16.mxu0 0
    %1136 = vmatpush1.bf16.msra.mxu0 0
    %1137 = vmatprep.subr.bf16.mxu0 0
    %1138 = vmatpush1.bf16.msra.mxu0 0
    %1139 = vmatprep.subr.bf16.mxu0 0
    %1140 = vmatpush1.bf16.msra.mxu0 0
    %1141 = vmatprep.subr.bf16.mxu0 0
    %1142 = vmatpush1.bf16.msra.mxu0 0
    %1143 = vmatprep.subr.bf16.mxu0 0
    %1144 = vmatpush1.bf16.msra.mxu0 0
    %1145 = vmatprep.subr.bf16.mxu0 0
    %1146 = vmatpush1.bf16.msra.mxu0 0
    %1147 = vmatprep.subr.bf16.mxu0 0
    %1148 = vmatpush1.bf16.msra.mxu0 0
    %1149 = vmatprep.subr.bf16.mxu0 0
    %1150 = vmatpush1.bf16.msra.mxu0 0
    %1151 = vmatprep.subr.bf16.mxu0 0
    %1152 = vmatpush1.bf16.msra.mxu0 0
    %1153 = vmatprep.subr.bf16.mxu0 0
    %1154 = vmatpush1.bf16.msra.mxu0 0
    %1155 = vmatprep.subr.bf16.mxu0 0
    %1156 = vmatpush1.bf16.msra.mxu0 0
    %1157 = vmatprep.subr.bf16.mxu0 0
    %1158 = vmatpush1.bf16.msra.mxu0 0
    %1159 = vmatprep.mubr.bf16.mxu0 0
    %1160 = vmatmul.mubr.bf16.gmra.mrb[0].mxu0 %v1125
    %v1161 = vpop.f32.mrb[0].mxu0
    %v1162 = vadd.f32 %v1111, %v1161
    %v1163 = vpop.f32.mrb[0].mxu0
    %v1164 = vpop.f32.mrb[0].mxu0
    %v1165 = vadd.f32 %v1111, %v1164
    %v1166 = vpop.f32.mrb[0].mxu0
    %1167 = vdwg.mxu0
    %v1168 = vmax.f32 %v1162, 0.0
    %v1169 = vmax.f32 %v1165, 0.0
    %v1170 = vpack.c.bf16 %v1169, %v1168
    %v1179 = vunpack.c.l.b16 %v31
    %v1180 = vunpack.c.l.b16 %v32
    %v1181 = vunpack.c.l.b16 %v33
    %v1182 = vunpack.c.l.b16 %v34
    %v1183 = vunpack.c.l.b16 %v35
    %v1184 = vunpack.c.l.b16 %v36
    %v1185 = vunpack.c.l.b16 %v37
    %v1186 = vunpack.c.l.b16 %v38
    %v1187 = vpack.c.b16 %v1180, %v1179
    %v1188 = vpack.c.b16 %v1182, %v1181
    %v1189 = vpack.c.b16 %v1184, %v1183
    %v1190 = vpack.c.b16 %v1186, %v1185
    %1196 = vrot.lane.b32.xlu0 %v1064, 96
    %v1197 = vpop.permute.xlu0 %1196
    %vm1199 = vcmask 523264
    %v1201 = vsel %vm1199, %v1170, 0
    %1203 = vmatprep.subr.bf16.mxu0 0
    %1204 = vmatpush1.bf16.msra.mxu0 %v1187
    %1205 = vmatprep.subr.bf16.mxu0 0
    %1206 = vmatpush1.bf16.msra.mxu0 %v1188
    %1207 = vmatprep.subr.bf16.mxu0 0
    %1208 = vmatpush1.bf16.msra.mxu0 %v1189
    %1209 = vmatprep.subr.bf16.mxu0 0
    %1210 = vmatpush1.bf16.msra.mxu0 %v1190
    %1211 = vmatprep.subr.bf16.mxu0 0
    %1212 = vmatpush1.bf16.msra.mxu0 0
    %1213 = vmatprep.subr.bf16.mxu0 0
    %1214 = vmatpush1.bf16.msra.mxu0 0
    %1215 = vmatprep.subr.bf16.mxu0 0
    %1216 = vmatpush1.bf16.msra.mxu0 0
    %1217 = vmatprep.subr.bf16.mxu0 0
    %1218 = vmatpush1.bf16.msra.mxu0 0
    %1219 = vmatprep.subr.bf16.mxu0 0
    %1220 = vmatpush1.bf16.msra.mxu0 0
    %1221 = vmatprep.subr.bf16.mxu0 0
    %1222 = vmatpush1.bf16.msra.mxu0 0
    %1223 = vmatprep.subr.bf16.mxu0 0
    %1224 = vmatpush1.bf16.msra.mxu0 0
    %1225 = vmatprep.subr.bf16.mxu0 0
    %1226 = vmatpush1.bf16.msra.mxu0 0
    %1227 = vmatprep.subr.bf16.mxu0 0
    %1228 = vmatpush1.bf16.msra.mxu0 0
    %1229 = vmatprep.subr.bf16.mxu0 0
    %1230 = vmatpush1.bf16.msra.mxu0 0
    %1231 = vmatprep.subr.bf16.mxu0 0
    %1232 = vmatpush1.bf16.msra.mxu0 0
    %1233 = vmatprep.subr.bf16.mxu0 0
    %1234 = vmatpush1.bf16.msra.mxu0 0
    %1235 = vmatprep.mubr.bf16.mxu0 0
    %1236 = vmatmul.mubr.bf16.gmra.mrb[0].mxu0 %v1201
    %v1237 = vpop.f32.mrb[0].mxu0
    %v1238 = vadd.f32 %v1197, %v1237
    %v1239 = vpop.f32.mrb[0].mxu0
    %v1240 = vpop.f32.mrb[0].mxu0
    %v1241 = vadd.f32 %v1197, %v1240
    %v1242 = vpop.f32.mrb[0].mxu0
    %1243 = vdwg.mxu0
    %v1244 = vadd.f32 %v1067, %v1238
    %v1245 = vadd.f32 %v1068, %v1241
    %1246 = vst.msk [vmem:[#allocation2] sm:$0xff] %vm41, %v1244
    %1247 = vst.msk [vmem:[#allocation2 + $0x8] sm:$0xff] %vm41, %v1245
    // Predicated region
    $region18: #{tpu_custom_call.1} parent=1 // pred_check
      _
    $region19: #{tpu_custom_call.1} parent=1 // pred_check_branch
      %1249 = sbr.rel (0) target = $region21
    $region20: #{tpu_custom_call.1} parent=1 // pred_region
      %s1251 = ssub.s32 256, 256
      %1252 = vsyncadd [#allocation3], %s1251
      %s1253 = sshll.u32 [#allocation2], 4
      %s1254 = int_to_ptr.vmem [resolvable:$true] %s1253
      %1259 = dma.vmem_to_hbm [thread:$0]  %s1254, 256, %s4, [#allocation3], 128, 128, 8
    $region21: #{tpu_custom_call.1} parent=1 // pred_fallthru
      _
    // Predicated region
    $region22: #{tpu_custom_call.1} parent=1 // pred_check
      _
    $region23: #{tpu_custom_call.1} parent=1 // pred_check_branch
      %1261 = sbr.rel (0) target = $region25
    $region24: #{tpu_custom_call.1} parent=1 // pred_region
      %1262 = dma.done [#allocation3], 256
    $region25: #{tpu_custom_call.1} parent=1 // pred_fallthru
      _
    %1263 = vsyncpa [#allocation3], 1

</llo_original>
